<compile_context>
chip_gen: v6e
topology: v6e:2x2x1
jax: 0.10.0
libtpu: 0.0.40
codegen_flags: <defaults>
</compile_context>

<pallas_src>
import functools

import numpy as np
import jax
import jax.numpy as jnp
from jax.experimental import pallas as pl
from jax.experimental.pallas import tpu as pltpu

KSIZE = 7
PAD = KSIZE // 2
LANE = 128


def _round_up(v, m):
    return (v + m - 1) // m * m


# --------------------------------------------------------------------------- #
# Kernel
# --------------------------------------------------------------------------- #
def _cbam_kernel(x_ref, w1t_ref, w2t_ref, wm_ref, o_ref, *, hw_true, use_mxu_mlp):
    """One grid step: CBAM forward for a (Bt, C, HWp) block of the batch.

    x_ref  : (Bt, C, HWp)   input, lane-dense flattened spatial dims (zero padded)
    w1t_ref: (C, CrP)       fc[0] weight, transposed (CrP lane-padded on MXU path)
    w2t_ref: (CrP, C)       fc[2] weight, transposed
    wm_ref : (2*HWp, HWp)   fused 7x7 zero-padded conv as a dense matrix
    o_ref  : (Bt, C, HWp)
    """
    x = x_ref[...].astype(jnp.float32)                       # (Bt, C, HWp)
    Bt, C, HWp = x.shape

    # ---------------- channel attention (pool over the spatial/lane axis) -----
    if hw_true != HWp:                                       # lane padding present
        lane_idx = jax.lax.broadcasted_iota(jnp.int32, (1, 1, HWp), 2)
        x_for_max = jnp.where(lane_idx < hw_true, x, -jnp.inf)
    else:
        x_for_max = x
    avg_c = jnp.sum(x, axis=2) * (1.0 / float(hw_true))      # (Bt, C)  zero-pad safe
    max_c = jnp.max(x_for_max, axis=2)                       # (Bt, C)

    if use_mxu_mlp:
        # Shared MLP applied once to the stacked [avg ; max] pools, on the MXU.
        pools = jnp.concatenate([avg_c, max_c], axis=0)      # (2*Bt, C)
        h = jnp.maximum(
            jnp.dot(pools, w1t_ref[...], preferred_element_type=jnp.float32), 0.0)
        mlp = jnp.dot(h, w2t_ref[...], preferred_element_type=jnp.float32)  # (2*Bt, C)
        ca_logit = mlp[:Bt] + mlp[Bt:]
    else:
        # Tiny-C fallback: exact VPU form (avoids MXU-unfriendly K/N of 1-4).
        pools = jnp.stack([avg_c, max_c], axis=0)            # (2, Bt, C)
        h = jnp.maximum(jnp.sum(pools[..., :, None] * w1t_ref[...], axis=-2), 0.0)
        mlp = jnp.sum(h[..., :, None] * w2t_ref[...], axis=-2)              # (2, Bt, C)
        ca_logit = mlp[0] + mlp[1]
    ca = jax.nn.sigmoid(ca_logit)                            # (Bt, C)
    x_ca = x * ca[:, :, None]                                # channel-attended x

    # ---------------- spatial attention: 7x7 conv fused into ONE MXU matmul ---
    avg_s = jnp.mean(x_ca, axis=1)                           # (Bt, HWp)
    max_s = jnp.max(x_ca, axis=1)                            # (Bt, HWp)
    lhs = jnp.concatenate([avg_s, max_s], axis=-1).astype(wm_ref.dtype)      # (Bt, 2*HWp)
    conv = jnp.dot(lhs, wm_ref[...], preferred_element_type=jnp.float32)     # (Bt, HWp)
    sa = jax.nn.sigmoid(conv)
    o_ref[...] = (x_ca * sa[:, None, :]).astype(o_ref.dtype)


# --------------------------------------------------------------------------- #
# Host-side weight preprocessing & planning
# --------------------------------------------------------------------------- #
def _spatial_conv_matrix(wconv, H, W, hw_pad, dtype):
    """Conv2d(2->1, k=7, pad=3, no bias) as a fused dense (2*hw_pad, hw_pad) matrix.

    Rows [0, H*W) multiply the avg-pooled map, rows [hw_pad, hw_pad+H*W) the
    max-pooled map, so  conv = concat([avg_s, max_s], -1) @ M  reproduces the
    zero-padded cross-correlation exactly.  Host-side, once per weight set.
    """
    w = np.asarray(wconv, dtype=np.float32).reshape(2, KSIZE, KSIZE)
    HW = H * W
    yp = np.arange(H)[:, None, None, None]                   # source row
    xp = np.arange(W)[None, :, None, None]                   # source col
    yq = np.arange(H)[None, None, :, None]                   # output row
    xq = np.arange(W)[None, None, None, :]                   # output col
    dy = yp - yq + PAD
    dx = xp - xq + PAD
    valid = (dy >= 0) & (dy < KSIZE) & (dx >= 0) & (dx < KSIZE)
    dyc = np.clip(dy, 0, KSIZE - 1)
    dxc = np.clip(dx, 0, KSIZE - 1)
    full = np.zeros((2 * hw_pad, hw_pad), dtype=np.float32)
    for c in range(2):
        m = np.where(valid, w[c][dyc, dxc], 0.0).reshape(HW, HW)
        full[c * hw_pad:c * hw_pad + HW, :HW] = m
    return jnp.asarray(full, dtype=dtype)


def _vmem_ceiling_bytes():
    """Generation-aware scoped-VMEM ceiling (half the physical VMEM per core)."""
    try:
        phys = int(pltpu.get_tpu_info().vmem_capacity_bytes)
    except Exception:
        phys = 64 << 20                                      # v7x per-core VMEM
    return max(phys // 2, 16 << 20)


def _pick_batch_block(B, C, HWp, itemsize, weight_bytes, vmem_budget):
    """Largest divisor of B whose per-step footprint fits the VMEM budget.

    Counts double-buffered in+out tiles at the I/O itemsize, ~3x (Bt,C,HWp) f32
    in-kernel intermediates, and the (single-buffered) weight arrays; C padded to
    the 8-sublane granule.  Keeps the grid >= 2 steps so v7x's two TensorCores can
    split the batch axis and the DMA/compute pipeline has something to overlap.
    """
    c_pad = _round_up(max(C, 1), 8)
    per_b = c_pad * HWp * (4 * itemsize + 3 * 4)
    avail = max(vmem_budget - weight_bytes, per_b)
    bt = max(1, min(B, avail // per_b))
    if B >= 2:
        bt = min(bt, B // 2)                                 # >= 2 grid steps
    bt = max(int(bt), 1)
    while B % bt:
        bt -= 1
    return bt


# --------------------------------------------------------------------------- #
# Public wrapper
# --------------------------------------------------------------------------- #
def cbam_forward(x, w1, w2, wconv, *, batch_block=None, conv_dtype=jnp.bfloat16):
    """CBAM forward.  x: (B, C, H, W); w1: (Cr, C); w2: (C, Cr); wconv: (1, 2, 7, 7).

    conv_dtype controls the fused conv matrix precision (bf16 halves its VMEM/HBM
    footprint and runs the MXU at native rate; pass jnp.float32 for exact).
    """
    B, C, H, W = x.shape
    HW = H * W
    Cr = int(w1.shape[0])
    HWp = _round_up(HW, LANE)                                # lane-dense last dim

    # Lane-dense layout: flatten spatial dims, zero-pad H*W to a multiple of 128.
    x_flat = x.reshape(B, C, HW)
    if HWp != HW:
        x_flat = jnp.pad(x_flat, ((0, 0), (0, 0), (0, HWp - HW)))

    wm = _spatial_conv_matrix(wconv, H, W, HWp, conv_dtype)  # (2*HWp, HWp)

    # Shared-MLP weights, transposed on host.  On the MXU path the reduced dim is
    # zero-padded to a lane multiple so both matmuls have standard K/N shapes
    # (exact: padded h columns are relu(0)=0 and meet zero rows of w2^T).
    use_mxu_mlp = C >= 8
    w1_np = np.asarray(w1, np.float32)
    w2_np = np.asarray(w2, np.float32)
    if use_mxu_mlp:
        crp = _round_up(max(Cr, 1), LANE)
        w1t_np = np.zeros((C, crp), np.float32)
        w1t_np[:, :Cr] = w1_np.T
        w2t_np = np.zeros((crp, C), np.float32)
        w2t_np[:Cr, :] = w2_np.T
    else:
        crp = Cr
        w1t_np = np.ascontiguousarray(w1_np.T)               # (C, Cr)
        w2t_np = np.ascontiguousarray(w2_np.T)               # (Cr, C)
    w1t = jnp.asarray(w1t_np)
    w2t = jnp.asarray(w2t_np)

    ceiling = _vmem_ceiling_bytes()
    weight_bytes = wm.size * wm.dtype.itemsize + (w1t.size + w2t.size) * 4
    if batch_block is None:
        batch_block = _pick_batch_block(B, C, HWp, x.dtype.itemsize,
                                        weight_bytes, int(0.7 * ceiling))
    if B % batch_block != 0:
        raise ValueError(f"batch_block={batch_block} must evenly divide batch B={B}")

    kernel = functools.partial(_cbam_kernel, hw_true=HW, use_mxu_mlp=use_mxu_mlp)
    grid = (B // batch_block,)

    def _call(single_buffer_weights):
        wkw = {"pipeline_mode": pl.Buffered(1)} if single_buffer_weights else {}
        return pl.pallas_call(
            kernel,
            out_shape=jax.ShapeDtypeStruct((B, C, HWp), x.dtype),
            grid=grid,
            in_specs=[
                pl.BlockSpec((batch_block, C, HWp), lambda i: (i, 0, 0)),
                pl.BlockSpec((C, crp), lambda i: (0, 0), **wkw),
                pl.BlockSpec((crp, C), lambda i: (0, 0), **wkw),
                pl.BlockSpec((2 * HWp, HWp), lambda i: (0, 0), **wkw),
            ],
            out_specs=pl.BlockSpec((batch_block, C, HWp), lambda i: (i, 0, 0)),
            compiler_params=pltpu.CompilerParams(
                dimension_semantics=("parallel",),           # batch axis -> megacore
                vmem_limit_bytes=int(ceiling)),
        )(x_flat, w1t, w2t, wm)

    try:
        # Constant-index weights: single-buffer them so VMEM is not wasted on a
        # second copy (freed VMEM goes into a larger batch_block).
        out_flat = _call(single_buffer_weights=True)
    except Exception:
        # Feature-detect fallback: if this Pallas build rejects pipeline_mode on
        # pallas_call operands, default (double-buffered) weights are still correct.
        out_flat = _call(single_buffer_weights=False)

    if HWp != HW:
        out_flat = out_flat[:, :, :HW]
    return out_flat.reshape(B, C, H, W)


# --------------------------------------------------------------------------- #
# Pure-JAX reference (mirrors the PyTorch CBAM module)
# --------------------------------------------------------------------------- #
def cbam_reference(x, w1, w2, wconv):
    xf = x.astype(jnp.float32)
    avg = jnp.mean(xf, axis=(2, 3))                          # (B, C)
    mx = jnp.max(xf, axis=(2, 3))                            # (B, C)

    def fc(v):
        h = jnp.maximum(jnp.dot(v, w1.T, precision="highest"), 0.0)
        return jnp.dot(h, w2.T, precision="highest")

    ca = jax.nn.sigmoid(fc(avg) + fc(mx))[:, :, None, None]
    x_ca = xf * ca
    avg_s = jnp.mean(x_ca, axis=1, keepdims=True)
    max_s = jnp.max(x_ca, axis=1, keepdims=True)
    amap = jnp.concatenate([avg_s, max_s], axis=1)           # (B, 2, H, W)
    conv = jax.lax.conv_general_dilated(
        amap, wconv, window_strides=(1, 1), padding="SAME",
        dimension_numbers=("NCHW", "OIHW", "NCHW"),
        precision=jax.lax.Precision.HIGHEST)
    sa = jax.nn.sigmoid(conv)
    return x_ca * sa


if __name__ == "__main__":
    key = jax.random.PRNGKey(0)

    # ---- Test 1: small shape, exact (f32) conv matrix, tiny-C VPU MLP path ----
    B, C, H, W = 2, 4, 16, 16
    reduction = 16
    Cr = max(C // reduction, 1)
    key, kx, k1, k2, kc = jax.random.split(key, 5)
    x = jax.random.normal(kx, (B, C, H, W), dtype=jnp.float32)
    w1 = jax.random.normal(k1, (Cr, C), dtype=jnp.float32) * 0.5    # fc[0]: C -> Cr (1x1, no bias)
    w2 = jax.random.normal(k2, (C, Cr), dtype=jnp.float32) * 0.5    # fc[2]: Cr -> C (1x1, no bias)
    wconv = jax.random.normal(kc, (1, 2, KSIZE, KSIZE), dtype=jnp.float32) * 0.1

    out = jax.block_until_ready(cbam_forward(x, w1, w2, wconv, conv_dtype=jnp.float32))
    ref = cbam_reference(x, w1, w2, wconv)
    assert out.shape == (B, C, H, W)
    # Tolerance covers MXU vs XLA-conv f32 accumulation-order differences.
    assert jnp.allclose(out, ref, atol=2e-3, rtol=1e-3), "mismatch vs reference (f32 path)"

    # ---- Test 2: realistic channels, bf16 conv matrix, MXU MLP, padded 14x14 --
    B, C, H, W = 4, 128, 14, 14
    reduction = 16
    Cr = max(C // reduction, 1)
    key, kx, k1, k2, kc = jax.random.split(key, 5)
    x = jax.random.normal(kx, (B, C, H, W), dtype=jnp.float32)
    w1 = jax.random.normal(k1, (Cr, C), dtype=jnp.float32) * 0.2
    w2 = jax.random.normal(k2, (C, Cr), dtype=jnp.float32) * 0.2
    wconv = jax.random.normal(kc, (1, 2, KSIZE, KSIZE), dtype=jnp.float32) * 0.1

    out = jax.block_until_ready(cbam_forward(x, w1, w2, wconv))     # bf16 conv matrix
    ref = cbam_reference(x, w1, w2, wconv)
    assert out.shape == (B, C, H, W)
    # Looser tolerance: the 7x7-conv operands run in bf16 (f32 accumulation).
    assert jnp.allclose(out, ref, atol=5e-2, rtol=5e-2), "mismatch vs reference (bf16 path)"

    print("KERNEL_OK")
</pallas_src>

<mosaic_0001>
module attributes {stable_mosaic.version = 11 : i64} {
  func.func @_cbam_kernel(%arg0: i32, %arg1: memref<1x4x256xf32, #tpu.memory_space<vmem>>, %arg2: memref<4x1xf32, #tpu.memory_space<vmem>>, %arg3: memref<1x4xf32, #tpu.memory_space<vmem>>, %arg4: memref<512x256xf32, #tpu.memory_space<vmem>>, %arg5: memref<1x4x256xf32, #tpu.memory_space<vmem>>) attributes {dimension_semantics = [#tpu.dimension_semantics<parallel>], iteration_bounds = array<i64: 2>, scalar_prefetch = 0 : i64, scratch_operands = 0 : i64, tpu.core_type = #tpu.core_type<tc>, window_params = [{transform_indices = @transform_0, window_bounds = array<i64: 1, 4, 256>}, {pipeline_mode = #tpu.pipeline_mode<synchronous>, transform_indices = @transform_1, window_bounds = array<i64: 4, 1>}, {pipeline_mode = #tpu.pipeline_mode<synchronous>, transform_indices = @transform_2, window_bounds = array<i64: 1, 4>}, {pipeline_mode = #tpu.pipeline_mode<synchronous>, transform_indices = @transform_3, window_bounds = array<i64: 512, 256>}, {transform_indices = @transform_4, window_bounds = array<i64: 1, 4, 256>}]} {
    %c0 = arith.constant 0 : index
    %c0_0 = arith.constant 0 : index
    %c0_1 = arith.constant 0 : index
    %0 = vector.load %arg1[%c0, %c0_0, %c0_1] : memref<1x4x256xf32, #tpu.memory_space<vmem>>, vector<1x4x256xf32>
    %cst = arith.constant dense<0.000000e+00> : vector<1x4xf32>
    %1 = vector.multi_reduction <add>, %0, %cst [2] : vector<1x4x256xf32> to vector<1x4xf32>
    %cst_2 = arith.constant 3.906250e-03 : f32
    %2 = vector.broadcast %cst_2 : f32 to vector<1x4xf32>
    %3 = arith.mulf %1, %2 : vector<1x4xf32>
    %cst_3 = arith.constant dense<0xFF800000> : vector<1x4xf32>
    %4 = vector.multi_reduction <maximumf>, %0, %cst_3 [2] : vector<1x4x256xf32> to vector<1x4xf32>
    %5 = vector.shape_cast %3 : vector<1x4xf32> to vector<1x1x4xf32>
    %6 = vector.shape_cast %4 : vector<1x4xf32> to vector<1x1x4xf32>
    %7 = tpu.concatenate %5, %6 in 0 : vector<1x1x4xf32>, vector<1x1x4xf32> -> vector<2x1x4xf32>
    %8 = vector.shape_cast %7 : vector<2x1x4xf32> to vector<2x1x4x1xf32>
    %c0_4 = arith.constant 0 : index
    %c0_5 = arith.constant 0 : index
    %9 = vector.load %arg2[%c0_4, %c0_5] : memref<4x1xf32, #tpu.memory_space<vmem>>, vector<4x1xf32>
    %10 = vector.shape_cast %9 : vector<4x1xf32> to vector<1x1x4x1xf32>
    %11 = vector.broadcast %10 : vector<1x1x4x1xf32> to vector<2x1x4x1xf32>
    %12 = arith.mulf %8, %11 : vector<2x1x4x1xf32>
    %cst_6 = arith.constant dense<0.000000e+00> : vector<2x1x1xf32>
    %13 = vector.multi_reduction <add>, %12, %cst_6 [2] : vector<2x1x4x1xf32> to vector<2x1x1xf32>
    %cst_7 = arith.constant 0.000000e+00 : f32
    %14 = vector.broadcast %cst_7 : f32 to vector<2x1x1xf32>
    %15 = arith.maximumf %13, %14 : vector<2x1x1xf32>
    %16 = vector.shape_cast %15 : vector<2x1x1xf32> to vector<2x1x1x1xf32>
    %c0_8 = arith.constant 0 : index
    %c0_9 = arith.constant 0 : index
    %17 = vector.load %arg3[%c0_8, %c0_9] : memref<1x4xf32, #tpu.memory_space<vmem>>, vector<1x4xf32>
    %18 = vector.shape_cast %17 : vector<1x4xf32> to vector<1x1x1x4xf32>
    %19 = vector.broadcast %16 : vector<2x1x1x1xf32> to vector<2x1x1x4xf32>
    %20 = vector.broadcast %18 : vector<1x1x1x4xf32> to vector<2x1x1x4xf32>
    %21 = arith.mulf %19, %20 : vector<2x1x1x4xf32>
    %cst_10 = arith.constant dense<0.000000e+00> : vector<2x1x4xf32>
    %22 = vector.multi_reduction <add>, %21, %cst_10 [2] : vector<2x1x1x4xf32> to vector<2x1x4xf32>
    %23 = vector.extract_strided_slice %22 {offsets = [0, 0, 0], sizes = [1, 1, 4], strides = [1, 1, 1]} : vector<2x1x4xf32> to vector<1x1x4xf32>
    %24 = vector.shape_cast %23 : vector<1x1x4xf32> to vector<1x4xf32>
    %25 = vector.extract_strided_slice %22 {offsets = [1, 0, 0], sizes = [1, 1, 4], strides = [1, 1, 1]} : vector<2x1x4xf32> to vector<1x1x4xf32>
    %26 = vector.shape_cast %25 : vector<1x1x4xf32> to vector<1x4xf32>
    %27 = arith.addf %24, %26 : vector<1x4xf32>
    %28 = arith.negf %27 : vector<1x4xf32>
    %29 = math.exp %28 : vector<1x4xf32>
    %cst_11 = arith.constant 1.000000e+00 : f32
    %30 = vector.broadcast %cst_11 : f32 to vector<1x4xf32>
    %31 = arith.addf %30, %29 : vector<1x4xf32>
    %32 = arith.divf %30, %31 : vector<1x4xf32>
    %33 = vector.shape_cast %32 : vector<1x4xf32> to vector<1x4x1xf32>
    %34 = vector.broadcast %33 : vector<1x4x1xf32> to vector<1x4x256xf32>
    %35 = arith.mulf %0, %34 : vector<1x4x256xf32>
    %cst_12 = arith.constant dense<0.000000e+00> : vector<1x256xf32>
    %36 = vector.multi_reduction <add>, %35, %cst_12 [1] : vector<1x4x256xf32> to vector<1x256xf32>
    %cst_13 = arith.constant 4.000000e+00 : f32
    %37 = vector.broadcast %cst_13 : f32 to vector<1x256xf32>
    %38 = arith.divf %36, %37 : vector<1x256xf32>
    %cst_14 = arith.constant dense<0xFF800000> : vector<1x256xf32>
    %39 = vector.multi_reduction <maximumf>, %35, %cst_14 [1] : vector<1x4x256xf32> to vector<1x256xf32>
    %40 = tpu.concatenate %38, %39 in 1 : vector<1x256xf32>, vector<1x256xf32> -> vector<1x512xf32>
    %c0_15 = arith.constant 0 : index
    %c0_16 = arith.constant 0 : index
    %41 = vector.load %arg4[%c0_15, %c0_16] : memref<512x256xf32, #tpu.memory_space<vmem>>, vector<512x256xf32>
    %cst_17 = arith.constant dense<0.000000e+00> : vector<1x256xf32>
    %42 = tpu.matmul %40, %41, %cst_17 {dimension_numbers = #tpu.dot_dimension_numbers<[1], [0], [0], [1], [0, 0, 1, 1], [], []>} : vector<1x512xf32>, vector<512x256xf32>, vector<1x256xf32> -> vector<1x256xf32>
    %43 = arith.negf %42 : vector<1x256xf32>
    %44 = math.exp %43 : vector<1x256xf32>
    %cst_18 = arith.constant 1.000000e+00 : f32
    %45 = vector.broadcast %cst_18 : f32 to vector<1x256xf32>
    %46 = arith.addf %45, %44 : vector<1x256xf32>
    %47 = arith.divf %45, %46 : vector<1x256xf32>
    %48 = vector.shape_cast %47 : vector<1x256xf32> to vector<1x1x256xf32>
    %49 = vector.broadcast %48 : vector<1x1x256xf32> to vector<1x4x256xf32>
    %50 = arith.mulf %35, %49 : vector<1x4x256xf32>
    %c0_19 = arith.constant 0 : index
    %c0_20 = arith.constant 0 : index
    %c0_21 = arith.constant 0 : index
    %51 = vector.load %arg5[%c0_19, %c0_20, %c0_21] : memref<1x4x256xf32, #tpu.memory_space<vmem>>, vector<1x4x256xf32>
    tpu.vector_store %arg5[%c0_19, %c0_20, %c0_21], %50 {strides = array<i32>} : memref<1x4x256xf32, #tpu.memory_space<vmem>>, vector<1x4x256xf32>,
    return
  }
  func.func @transform_0(%arg0: i32) -> (i32, i32, i32) {
    %c0_i32 = arith.constant 0 : i32
    %c0_i32_0 = arith.constant 0 : i32
    %c0_i32_1 = arith.constant 0 : i32
    return %arg0, %c0_i32, %c0_i32_0 : i32, i32, i32
  }
  func.func @transform_1(%arg0: i32) -> (i32, i32) {
    %c0_i32 = arith.constant 0 : i32
    %c0_i32_0 = arith.constant 0 : i32
    %c0_i32_1 = arith.constant 0 : i32
    return %c0_i32, %c0_i32_0 : i32, i32
  }
  func.func @transform_2(%arg0: i32) -> (i32, i32) {
    %c0_i32 = arith.constant 0 : i32
    %c0_i32_0 = arith.constant 0 : i32
    %c0_i32_1 = arith.constant 0 : i32
    return %c0_i32, %c0_i32_0 : i32, i32
  }
  func.func @transform_3(%arg0: i32) -> (i32, i32) {
    %c0_i32 = arith.constant 0 : i32
    %c0_i32_0 = arith.constant 0 : i32
    %c0_i32_1 = arith.constant 0 : i32
    return %c0_i32, %c0_i32_0 : i32, i32
  }
  func.func @transform_4(%arg0: i32) -> (i32, i32, i32) {
    %c0_i32 = arith.constant 0 : i32
    %c0_i32_0 = arith.constant 0 : i32
    %c0_i32_1 = arith.constant 0 : i32
    return %arg0, %c0_i32, %c0_i32_0 : i32, i32, i32
  }
}

module attributes {stable_mosaic.version = 11 : i64} {
  func.func @_cbam_kernel(%arg0: i32, %arg1: memref<1x4x256xf32, #tpu.memory_space<vmem>>, %arg2: memref<4x1xf32, #tpu.memory_space<vmem>>, %arg3: memref<1x4xf32, #tpu.memory_space<vmem>>, %arg4: memref<512x256xf32, #tpu.memory_space<vmem>>, %arg5: memref<1x4x256xf32, #tpu.memory_space<vmem>>) attributes {dimension_semantics = [#tpu.dimension_semantics<parallel>], iteration_bounds = array<i64: 2>, scalar_prefetch = 0 : i64, scratch_operands = 0 : i64, tpu.core_type = #tpu.core_type<tc>, window_params = [{transform_indices = @transform_0, window_bounds = array<i64: 1, 4, 256>}, {pipeline_mode = #tpu.pipeline_mode<synchronous>, transform_indices = @transform_1, window_bounds = array<i64: 4, 1>}, {pipeline_mode = #tpu.pipeline_mode<synchronous>, transform_indices = @transform_2, window_bounds = array<i64: 1, 4>}, {pipeline_mode = #tpu.pipeline_mode<synchronous>, transform_indices = @transform_3, window_bounds = array<i64: 512, 256>}, {transform_indices = @transform_4, window_bounds = array<i64: 1, 4, 256>}]} {
    %c0 = arith.constant 0 : index
    %c0_0 = arith.constant 0 : index
    %c0_1 = arith.constant 0 : index
    %0 = vector.load %arg1[%c0, %c0_0, %c0_1] : memref<1x4x256xf32, #tpu.memory_space<vmem>>, vector<1x4x256xf32>
    %cst = arith.constant dense<0.000000e+00> : vector<1x4xf32>
    %1 = vector.multi_reduction <add>, %0, %cst [2] : vector<1x4x256xf32> to vector<1x4xf32>
    %cst_2 = arith.constant 3.906250e-03 : f32
    %2 = vector.broadcast %cst_2 : f32 to vector<1x4xf32>
    %3 = arith.mulf %1, %2 : vector<1x4xf32>
    %cst_3 = arith.constant dense<0xFF800000> : vector<1x4xf32>
    %4 = vector.multi_reduction <maximumf>, %0, %cst_3 [2] : vector<1x4x256xf32> to vector<1x4xf32>
    %5 = vector.shape_cast %3 : vector<1x4xf32> to vector<1x1x4xf32>
    %6 = vector.shape_cast %4 : vector<1x4xf32> to vector<1x1x4xf32>
    %7 = tpu.concatenate %5, %6 in 0 : vector<1x1x4xf32>, vector<1x1x4xf32> -> vector<2x1x4xf32>
    %8 = vector.shape_cast %7 : vector<2x1x4xf32> to vector<2x1x4x1xf32>
    %c0_4 = arith.constant 0 : index
    %c0_5 = arith.constant 0 : index
    %9 = vector.load %arg2[%c0_4, %c0_5] : memref<4x1xf32, #tpu.memory_space<vmem>>, vector<4x1xf32>
    %10 = vector.shape_cast %9 : vector<4x1xf32> to vector<1x1x4x1xf32>
    %11 = vector.broadcast %10 : vector<1x1x4x1xf32> to vector<2x1x4x1xf32>
    %12 = arith.mulf %8, %11 : vector<2x1x4x1xf32>
    %cst_6 = arith.constant dense<0.000000e+00> : vector<2x1x1xf32>
    %13 = vector.multi_reduction <add>, %12, %cst_6 [2] : vector<2x1x4x1xf32> to vector<2x1x1xf32>
    %cst_7 = arith.constant 0.000000e+00 : f32
    %14 = vector.broadcast %cst_7 : f32 to vector<2x1x1xf32>
    %15 = arith.maximumf %13, %14 : vector<2x1x1xf32>
    %16 = vector.shape_cast %15 : vector<2x1x1xf32> to vector<2x1x1x1xf32>
    %c0_8 = arith.constant 0 : index
    %c0_9 = arith.constant 0 : index
    %17 = vector.load %arg3[%c0_8, %c0_9] : memref<1x4xf32, #tpu.memory_space<vmem>>, vector<1x4xf32>
    %18 = vector.shape_cast %17 : vector<1x4xf32> to vector<1x1x1x4xf32>
    %19 = vector.broadcast %16 : vector<2x1x1x1xf32> to vector<2x1x1x4xf32>
    %20 = vector.broadcast %18 : vector<1x1x1x4xf32> to vector<2x1x1x4xf32>
    %21 = arith.mulf %19, %20 : vector<2x1x1x4xf32>
    %cst_10 = arith.constant dense<0.000000e+00> : vector<2x1x4xf32>
    %22 = vector.multi_reduction <add>, %21, %cst_10 [2] : vector<2x1x1x4xf32> to vector<2x1x4xf32>
    %23 = vector.extract_strided_slice %22 {offsets = [0, 0, 0], sizes = [1, 1, 4], strides = [1, 1, 1]} : vector<2x1x4xf32> to vector<1x1x4xf32>
    %24 = vector.shape_cast %23 : vector<1x1x4xf32> to vector<1x4xf32>
    %25 = vector.extract_strided_slice %22 {offsets = [1, 0, 0], sizes = [1, 1, 4], strides = [1, 1, 1]} : vector<2x1x4xf32> to vector<1x1x4xf32>
    %26 = vector.shape_cast %25 : vector<1x1x4xf32> to vector<1x4xf32>
    %27 = arith.addf %24, %26 : vector<1x4xf32>
    %28 = arith.negf %27 : vector<1x4xf32>
    %29 = math.exp %28 : vector<1x4xf32>
    %cst_11 = arith.constant 1.000000e+00 : f32
    %30 = vector.broadcast %cst_11 : f32 to vector<1x4xf32>
    %31 = arith.addf %30, %29 : vector<1x4xf32>
    %32 = arith.divf %30, %31 : vector<1x4xf32>
    %33 = vector.shape_cast %32 : vector<1x4xf32> to vector<1x4x1xf32>
    %34 = vector.broadcast %33 : vector<1x4x1xf32> to vector<1x4x256xf32>
    %35 = arith.mulf %0, %34 : vector<1x4x256xf32>
    %cst_12 = arith.constant dense<0.000000e+00> : vector<1x256xf32>
    %36 = vector.multi_reduction <add>, %35, %cst_12 [1] : vector<1x4x256xf32> to vector<1x256xf32>
    %cst_13 = arith.constant 4.000000e+00 : f32
    %37 = vector.broadcast %cst_13 : f32 to vector<1x256xf32>
    %38 = arith.divf %36, %37 : vector<1x256xf32>
    %cst_14 = arith.constant dense<0xFF800000> : vector<1x256xf32>
    %39 = vector.multi_reduction <maximumf>, %35, %cst_14 [1] : vector<1x4x256xf32> to vector<1x256xf32>
    %40 = tpu.concatenate %38, %39 in 1 : vector<1x256xf32>, vector<1x256xf32> -> vector<1x512xf32>
    %c0_15 = arith.constant 0 : index
    %c0_16 = arith.constant 0 : index
    %41 = vector.load %arg4[%c0_15, %c0_16] : memref<512x256xf32, #tpu.memory_space<vmem>>, vector<512x256xf32>
    %cst_17 = arith.constant dense<0.000000e+00> : vector<1x256xf32>
    %42 = tpu.matmul %40, %41, %cst_17 {dimension_numbers = #tpu.dot_dimension_numbers<[1], [0], [0], [1], [0, 0, 1, 1], [], []>} : vector<1x512xf32>, vector<512x256xf32>, vector<1x256xf32> -> vector<1x256xf32>
    %43 = arith.negf %42 : vector<1x256xf32>
    %44 = math.exp %43 : vector<1x256xf32>
    %cst_18 = arith.constant 1.000000e+00 : f32
    %45 = vector.broadcast %cst_18 : f32 to vector<1x256xf32>
    %46 = arith.addf %45, %44 : vector<1x256xf32>
    %47 = arith.divf %45, %46 : vector<1x256xf32>
    %48 = vector.shape_cast %47 : vector<1x256xf32> to vector<1x1x256xf32>
    %49 = vector.broadcast %48 : vector<1x1x256xf32> to vector<1x4x256xf32>
    %50 = arith.mulf %35, %49 : vector<1x4x256xf32>
    %c0_19 = arith.constant 0 : index
    %c0_20 = arith.constant 0 : index
    %c0_21 = arith.constant 0 : index
    %51 = vector.load %arg5[%c0_19, %c0_20, %c0_21] : memref<1x4x256xf32, #tpu.memory_space<vmem>>, vector<1x4x256xf32>
    tpu.vector_store %arg5[%c0_19, %c0_20, %c0_21], %50 {strides = array<i32>} : memref<1x4x256xf32, #tpu.memory_space<vmem>>, vector<1x4x256xf32>,
    return
  }
  func.func @transform_0(%arg0: i32) -> (i32, i32, i32) {
    %c0_i32 = arith.constant 0 : i32
    %c0_i32_0 = arith.constant 0 : i32
    %c0_i32_1 = arith.constant 0 : i32
    return %arg0, %c0_i32, %c0_i32_0 : i32, i32, i32
  }
  func.func @transform_1(%arg0: i32) -> (i32, i32) {
    %c0_i32 = arith.constant 0 : i32
    %c0_i32_0 = arith.constant 0 : i32
    %c0_i32_1 = arith.constant 0 : i32
    return %c0_i32, %c0_i32_0 : i32, i32
  }
  func.func @transform_2(%arg0: i32) -> (i32, i32) {
    %c0_i32 = arith.constant 0 : i32
    %c0_i32_0 = arith.constant 0 : i32
    %c0_i32_1 = arith.constant 0 : i32
    return %c0_i32, %c0_i32_0 : i32, i32
  }
  func.func @transform_3(%arg0: i32) -> (i32, i32) {
    %c0_i32 = arith.constant 0 : i32
    %c0_i32_0 = arith.constant 0 : i32
    %c0_i32_1 = arith.constant 0 : i32
    return %c0_i32, %c0_i32_0 : i32, i32
  }
  func.func @transform_4(%arg0: i32) -> (i32, i32, i32) {
    %c0_i32 = arith.constant 0 : i32
    %c0_i32_0 = arith.constant 0 : i32
    %c0_i32_1 = arith.constant 0 : i32
    return %arg0, %c0_i32, %c0_i32_0 : i32, i32, i32
  }
}

</mosaic_0001>

<llo_original>
// kernel: tpu_custom_call.1
$region0: #{tpu_custom_call.1}
  #allocation0 [shape = 'u32[]', space=smem, size = 0x4, offset = 0x4, fixed_abs, tag = 'smem constant byte address 0x4 - core index']
  #allocation1 [shape = 'u32[144,128]{1,0:T(1,128)}', space=vmem, size = 0x12000, scoped, tag = 'internal scratch']
  %s0 = inlined_call_operand.hbm [shape: f32[2,4,256], index: 0, kind: input, shape index: {}]
  %s1 = inlined_call_operand.vmem [shape: f32[4,1], index: 1, kind: input, shape index: {}]
  %s2 = inlined_call_operand.vmem [shape: f32[1,4], index: 2, kind: input, shape index: {}]
  %s3 = inlined_call_operand.hbm [shape: f32[512,256], index: 3, kind: input, shape index: {}]
  %s4 = inlined_call_operand.hbm [shape: f32[2,4,256], index: 4, kind: output, shape index: {}]
  %s5 = sld [smem:[#allocation0]]
  $region57: #{tpu_custom_call.1} parent=0
    _
  %s7 = ssub.s32 1, %s5
  %s8 = scalar_select 0, %s7, %s5
  $region1: #{tpu_custom_call.1} parent=0
    #allocation2 [shape = 'u8[8192]{0}', space=vmem, size = 0x2000, scoped, tag = 'input window, operand 0']
    #allocation3 [shape = 's32[2]{0}', space=sflag, size = 0x8, scoped, tag = 'scoped memory for tpu_custom_call.1']
    #allocation4 [shape = 's32[2]{0}', space=sflag, size = 0x8, scoped, tag = 'scoped memory for tpu_custom_call.1']
    #allocation5 [shape = 'u8[524288]{0}', space=vmem, size = 0x80000, scoped, tag = 'input window, operand 3, single buffered']
    #allocation6 [shape = 's32[1]{0}', space=sflag, size = 0x4, scoped, tag = 'scoped memory for tpu_custom_call.1']
    #allocation7 [shape = 'u8[8192]{0}', space=vmem, size = 0x2000, scoped, tag = 'output window, operand 0']
    %9 = vsyncpa [#allocation3], 0
    %s10 = scalar_lea.sflag [#allocation3], 1
    %11 = vsyncpa %s10, 0
    %12 = vsyncpa [#allocation6], 0
    %13 = vsyncpa [#allocation4], 0
    %s14 = scalar_lea.sflag [#allocation4], 1
    %15 = vsyncpa %s14, 0
    loop: start=0, step=1, limit=4
    $region2: #{tpu_custom_call.1} parent=1 // loop_pre_header
      _
    $region3: #{tpu_custom_call.1} parent=1 // loop_header
      %s17 = sphi 0, %s21
      %p18 = scmp.ge.s32.totalorder %s17, 4
      %s27 = sphi 0, %s29
      %s30 = sphi 0, %s27
      %s31 = sphi 0, %s30
      %s47 = sphi 0, %s31
      %s51 = sphi 0, %s51
      %s53 = sphi 0, %s51
      %s54 = sphi 0, %s53
      %s68 = sphi 0, %s54
      %s72 = sphi 0, %s72
      %s74 = sphi 0, %s72
      %s75 = sphi 0, %s74
      %s89 = sphi 0, %s75
      %s93 = sphi 0, %s93
      %s95 = sphi 0, %s93
      %s96 = sphi 0, %s95
      %s110 = sphi 0, %s96
      %s116 = sphi 0, %s118
      %s119 = sphi 0, %s116
      %s120 = sphi 0, %s119
      %s136 = sphi 0, %s120
    $region4: #{tpu_custom_call.1} parent=1 // loop_header_branch
      %20 = sbr.rel (%p18) target = $region8
    $region5: #{tpu_custom_call.1} parent=1 // loop_body
      %s22 = ssub.s32 %s17, 1
      %s23 = ssub.s32 %s17, 2
      %s24 = sadd.s32 %s17, 1
      %s25 = ssub.s32 %s17, %s24
      %p26 = scmp.eq.s32.totalorder %s25, 0
      %s28 = sadd.s32 %s27, 1
      %s29 = scalar_select %p26, %s27, %s28
      %p32 = pneg %p26
      %p33 = scmp.eq.s32.totalorder %s17, 1
      %p34 = por %p32, %p33
      %p35 = scmp.ne.s32.totalorder %s27, %s30
      %p36 = scmp.eq.s32.totalorder %s17, 0
      %p37 = por %p35, %p36
      %p38 = scmp.ne.s32.totalorder %s27, %s30
      %p39 = scmp.eq.s32.totalorder %s22, 1
      %p40 = por %p38, %p39
      %p41 = scmp.ne.s32.totalorder %s30, %s31
      %p42 = scmp.eq.s32.totalorder %s22, 0
      %p43 = por %p41, %p42
      %p44 = scmp.ne.s32.totalorder %s30, %s31
      %p45 = scmp.eq.s32.totalorder %s23, 1
      %p46 = por %p44, %p45
      %p48 = scmp.ne.s32.totalorder %s31, %s47
      %p49 = scmp.eq.s32.totalorder %s23, 0
      %p50 = por %p48, %p49
      %s52 = sadd.s32 %s51, 1
      %p55 = scmp.eq.s32.totalorder %s17, 1
      %p56 = scmp.ne.s32.totalorder %s51, %s53
      %p57 = scmp.eq.s32.totalorder %s17, 0
      %p58 = por %p56, %p57
      %p59 = scmp.ne.s32.totalorder %s51, %s53
      %p60 = scmp.eq.s32.totalorder %s22, 1
      %p61 = por %p59, %p60
      %p62 = scmp.ne.s32.totalorder %s53, %s54
      %p63 = scmp.eq.s32.totalorder %s22, 0
      %p64 = por %p62, %p63
      %p65 = scmp.ne.s32.totalorder %s53, %s54
      %p66 = scmp.eq.s32.totalorder %s23, 1
      %p67 = por %p65, %p66
      %p69 = scmp.ne.s32.totalorder %s54, %s68
      %p70 = scmp.eq.s32.totalorder %s23, 0
      %p71 = por %p69, %p70
      %s73 = sadd.s32 %s72, 1
      %p76 = scmp.eq.s32.totalorder %s17, 1
      %p77 = scmp.ne.s32.totalorder %s72, %s74
      %p78 = scmp.eq.s32.totalorder %s17, 0
      %p79 = por %p77, %p78
      %p80 = scmp.ne.s32.totalorder %s72, %s74
      %p81 = scmp.eq.s32.totalorder %s22, 1
      %p82 = por %p80, %p81
      %p83 = scmp.ne.s32.totalorder %s74, %s75
      %p84 = scmp.eq.s32.totalorder %s22, 0
      %p85 = por %p83, %p84
      %p86 = scmp.ne.s32.totalorder %s74, %s75
      %p87 = scmp.eq.s32.totalorder %s23, 1
      %p88 = por %p86, %p87
      %p90 = scmp.ne.s32.totalorder %s75, %s89
      %p91 = scmp.eq.s32.totalorder %s23, 0
      %p92 = por %p90, %p91
      %s94 = sadd.s32 %s93, 1
      %p97 = scmp.eq.s32.totalorder %s17, 1
      %p98 = scmp.ne.s32.totalorder %s93, %s95
      %p99 = scmp.eq.s32.totalorder %s17, 0
      %p100 = por %p98, %p99
      %p101 = scmp.ne.s32.totalorder %s93, %s95
      %p102 = scmp.eq.s32.totalorder %s22, 1
      %p103 = por %p101, %p102
      %p104 = scmp.ne.s32.totalorder %s95, %s96
      %p105 = scmp.eq.s32.totalorder %s22, 0
      %p106 = por %p104, %p105
      %p107 = scmp.ne.s32.totalorder %s95, %s96
      %p108 = scmp.eq.s32.totalorder %s23, 1
      %p109 = por %p107, %p108
      %p111 = scmp.ne.s32.totalorder %s96, %s110
      %p112 = scmp.eq.s32.totalorder %s23, 0
      %p113 = por %p111, %p112
      %s114 = ssub.s32 %s17, %s24
      %p115 = scmp.eq.s32.totalorder %s114, 0
      %s117 = sadd.s32 %s116, 1
      %s118 = scalar_select %p115, %s116, %s117
      %p121 = pneg %p115
      %p122 = scmp.eq.s32.totalorder %s17, 1
      %p123 = por %p121, %p122
      %p124 = scmp.ne.s32.totalorder %s116, %s119
      %p125 = scmp.eq.s32.totalorder %s17, 0
      %p126 = por %p124, %p125
      %p127 = scmp.ne.s32.totalorder %s116, %s119
      %p128 = scmp.eq.s32.totalorder %s22, 1
      %p129 = por %p127, %p128
      %p130 = scmp.ne.s32.totalorder %s119, %s120
      %p131 = scmp.eq.s32.totalorder %s22, 0
      %p132 = por %p130, %p131
      %p133 = scmp.ne.s32.totalorder %s119, %s120
      %p134 = scmp.eq.s32.totalorder %s23, 1
      %p135 = por %p133, %p134
      %p137 = scmp.ne.s32.totalorder %s120, %s136
      %p138 = scmp.eq.s32.totalorder %s23, 0
      %p139 = por %p137, %p138
      %p140 = scmp.le.s32.totalorder 1, %s17
      %p141 = scmp.lt.s32.totalorder %s17, 3
      %p142 = pnand %p140, %p141
      %p143 = pneg %p142
      // Predicated region
      $region9: #{tpu_custom_call.1} parent=5 // pred_check
        _
      $region10: #{tpu_custom_call.1} parent=5 // pred_check_branch
        %145 = sbr.rel (%p142) target = $region12
      $region11: #{tpu_custom_call.1} parent=5 // pred_region
        %s146 = ssub.s32 %s17, 1
        // Predicated region
        $region13: #{tpu_custom_call.1} parent=11 // pred_check
          %p147 = pneg %p64
        $region14: #{tpu_custom_call.1} parent=11 // pred_check_branch
          %149 = sbr.rel (%p147) target = $region16
        $region15: #{tpu_custom_call.1} parent=11 // pred_region
          _
        $region16: #{tpu_custom_call.1} parent=11 // pred_fallthru
          _
        // Predicated region
        $region17: #{tpu_custom_call.1} parent=11 // pred_check
          %p150 = pneg %p85
        $region18: #{tpu_custom_call.1} parent=11 // pred_check_branch
          %152 = sbr.rel (%p150) target = $region20
        $region19: #{tpu_custom_call.1} parent=11 // pred_region
          _
        $region20: #{tpu_custom_call.1} parent=11 // pred_fallthru
          _
        // Predicated region
        $region21: #{tpu_custom_call.1} parent=11 // pred_check
          %p153 = pneg %p106
        $region22: #{tpu_custom_call.1} parent=11 // pred_check_branch
          %155 = sbr.rel (%p153) target = $region24
        $region23: #{tpu_custom_call.1} parent=11 // pred_region
          %s157 = ssub.s32 16384, 16384
          %158 = vsyncadd [#allocation6], %s157
          %s159 = sshll.u32 [#allocation5], 4
          %s160 = int_to_ptr.vmem [resolvable:$true] %s159
          %165 = dma.hbm_to_vmem [thread:$0]  %s3, 16384, %s160, [#allocation6], 256, 256, 16
        $region24: #{tpu_custom_call.1} parent=11 // pred_fallthru
          _
      $region12: #{tpu_custom_call.1} parent=5 // pred_fallthru
        _
      %p166 = scmp.lt.s32.totalorder %s17, 2
      // Predicated region
      $region25: #{tpu_custom_call.1} parent=5 // pred_check
        %p167 = pneg %p166
      $region26: #{tpu_custom_call.1} parent=5 // pred_check_branch
        %169 = sbr.rel (%p167) target = $region28
      $region27: #{tpu_custom_call.1} parent=5 // pred_region
        // Predicated region
        $region29: #{tpu_custom_call.1} parent=27 // pred_check
          %p170 = pneg %p37
        $region30: #{tpu_custom_call.1} parent=27 // pred_check_branch
          %172 = sbr.rel (%p170) target = $region32
        $region31: #{tpu_custom_call.1} parent=27 // pred_region
          %s173 = sand.u32 %s27, 1
          %s174 = scalar_lea.sflag [#allocation3], %s173
          %s175 = sand.u32 %s27, 1
          %s176 = smul.addr %s175, 8
          %s177 = scalar_lea.vmem [#allocation2], %s176
          %s179 = ssub.s32 128, 128
          %180 = vsyncadd %s174, %s179
          %s181 = smul.addr %s17, 2
          %s182 = smul.addr %s181, 64
          %s183 = scalar_lea.hbm %s0, %s182
          %s185 = sshll.u32 %s177, 4
          %s186 = int_to_ptr.vmem [resolvable:$true] %s185
          %188 = dma.hbm_to_vmem [thread:$0]  %s183, 128, %s186, %s174
        $region32: #{tpu_custom_call.1} parent=27 // pred_fallthru
          _
      $region28: #{tpu_custom_call.1} parent=5 // pred_fallthru
        _
      %p189 = scmp.le.s32.totalorder 1, %s17
      %p190 = scmp.lt.s32.totalorder %s17, 3
      %p191 = pnand %p189, %p190
      %p192 = pneg %p191
      // Predicated region
      $region33: #{tpu_custom_call.1} parent=5 // pred_check
        _
      $region34: #{tpu_custom_call.1} parent=5 // pred_check_branch
        %194 = sbr.rel (%p191) target = $region36
      $region35: #{tpu_custom_call.1} parent=5 // pred_region
        %s195 = ssub.s32 %s17, 1
        %s196 = sand.u32 %s30, 1
        %s197 = scalar_lea.sflag [#allocation3], %s196
        %s198 = sand.u32 %s30, 1
        %s199 = smul.addr %s198, 8
        %s200 = scalar_lea.vmem [#allocation2], %s199
        // Predicated region
        $region37: #{tpu_custom_call.1} parent=35 // pred_check
          %p201 = pneg %p43
        $region38: #{tpu_custom_call.1} parent=35 // pred_check_branch
          %203 = sbr.rel (%p201) target = $region40
        $region39: #{tpu_custom_call.1} parent=35 // pred_region
          %204 = dma.done %s197, 128
        $region40: #{tpu_custom_call.1} parent=35 // pred_fallthru
          _
        // Predicated region
        $region41: #{tpu_custom_call.1} parent=35 // pred_check
          %p205 = pneg %p106
        $region42: #{tpu_custom_call.1} parent=35 // pred_check_branch
          %207 = sbr.rel (%p205) target = $region44
        $region43: #{tpu_custom_call.1} parent=35 // pred_region
          %208 = dma.done [#allocation6], 16384
        $region44: #{tpu_custom_call.1} parent=35 // pred_fallthru
          _
        %s209 = sand.u32 %s30, 1
        %s210 = scalar_lea.sflag [#allocation3], %s209
        %s211 = sand.u32 %s30, 1
        %s212 = smul.addr %s211, 8
        %s213 = scalar_lea.vmem [#allocation2], %s212
        %p214 = pneg %p43
        %p215 = pneg %p40
        %p216 = pneg %p64
        %p217 = pneg %p61
        %p218 = pneg %p85
        %p219 = pneg %p82
        %p220 = pneg %p106
        %p221 = pneg %p103
        %p222 = pneg %p132
        %p223 = pneg %p129
        %s224 = sand.u32 %s119, 1
        %s225 = scalar_lea.sflag [#allocation4], %s224
        %s226 = sand.u32 %s119, 1
        %s227 = smul.addr %s226, 8
        %s228 = scalar_lea.vmem [#allocation7], %s227
        %v229 = vld [vmem:[%s200] sm:$0xff]
        %v231 = vcombine.high %v229, %v229
        %vm233 = vcmask 1043456
        %v234 = vsel %vm233, %v229, 0.0
        %v235 = vsel %vm233, %v231, 0.0
        %v236 = vadd.f32 %v234, %v235
        %237 = vadd.xlane.f32.xlu0 %v236
        %v238 = vpop.xlane.xlu0 %237
        %v239 = vmul.f32 %v238, 0.00390625
        %v240 = vsel %vm233, %v229, -inf
        %v241 = vsel %vm233, %v231, -inf
        %v242 = vmax.f32 %v240, %v241
        %243 = vmax.xlane.f32.xlu0 %v242
        %v244 = vpop.xlane.xlu0 %243
        %v245 = vld [vmem:[%s1] sm:$0xf]
        %v246 = vmul.f32 %v239, %v245
        %v247 = vmul.f32 %v244, %v245
        %vm248 = vcmask 3072
        %v249 = vsel %vm248, %v246, 0.0
        %v250 = vrot.slane %v249, 4
        %v251 = vadd.f32 %v249, %v250
        %v252 = vrot.slane %v251, 2
        %v253 = vadd.f32 %v251, %v252
        %v254 = vrot.slane %v253, 1
        %v255 = vadd.f32 %v253, %v254
        %v256 = vsel %vm248, %v247, 0.0
        %v257 = vrot.slane %v256, 4
        %v258 = vadd.f32 %v256, %v257
        %v259 = vrot.slane %v258, 2
        %v260 = vadd.f32 %v258, %v259
        %v261 = vrot.slane %v260, 1
        %v262 = vadd.f32 %v260, %v261
        %v263 = vmax.f32 %v255, 0.0
        %v264 = vmax.f32 %v262, 0.0
        %v265 = vld [vmem:[%s2] sm:$0x1]
        %267 = vset.pattern.permute.xlu0 0
        %268 = vperm.xlu0 %267, %v263
        %v269 = vpop.permute.xlu0 %268
        %272 = vset.pattern.permute.xlu0 0
        %273 = vperm.xlu0 %272, %v264
        %v274 = vpop.permute.xlu0 %273
        %v276 = vmul.f32 %v269, %v265
        %v277 = vmul.f32 %v274, %v265
        %v278 = vadd.f32 %v276, 0.0
        %v279 = vadd.f32 %v277, 0.0
        %v280 = vadd.f32 %v278, %v279
        %v281 = vxor.u32 %v280, 2147483648
        %v282 = vmul.f32 %v281, 1.442695
        %v283 = vpow.pop %v282
        %v284 = vadd.f32 %v283, 1.0
        %v285 = vrcp.pop %v284
        %v286 = vmul.f32 1.0, %v285
        %v287 = vlaneseq
        %v288 = vshrl.u32 %v287, 7
        %v289 = vsub.s32 0, %v288
        %v290 = vrot.slane %v286, %v289
        %292 = vbcast.lane.b32.xlu0 %v290, 256
        %v293 = vpop.permute.xlu0 %292
        %v296 = vunpack.c.l.s4 839922192
        %v297 = vunpack.c.0.s8 %v296
        %v298 = vlaneseq
        %v299 = vshrl.u32 %v298, 7
        %v300 = vsub.s32 %v297, %v299
        %v301 = vrot.slane %v293, %v300
        %v303 = vmul.f32 %v229, %v301
        %v305 = vcombine.high %v303, %v303
        %v307 = vsel %vm233, %v303, 0.0
        %v308 = vrot.slane %v307, 4
        %v309 = vadd.f32 %v307, %v308
        %v310 = vrot.slane %v309, 2
        %v311 = vadd.f32 %v309, %v310
        %v312 = vrot.slane %v311, 1
        %v313 = vadd.f32 %v311, %v312
        %v314 = vsel %vm233, %v305, 0.0
        %v315 = vrot.slane %v314, 4
        %v316 = vadd.f32 %v314, %v315
        %v317 = vrot.slane %v316, 2
        %v318 = vadd.f32 %v316, %v317
        %v319 = vrot.slane %v318, 1
        %v320 = vadd.f32 %v318, %v319
        %v321 = vrcp.pop 4.0
        %v322 = vmul.f32 %v313, %v321
        %v323 = vmul.f32 %v320, %v321
        %v324 = vsel %vm233, %v303, -inf
        %v325 = vrot.slane %v324, 4
        %v326 = vmax.f32 %v324, %v325
        %v327 = vrot.slane %v326, 2
        %v328 = vmax.f32 %v326, %v327
        %v329 = vrot.slane %v328, 1
        %v330 = vmax.f32 %v328, %v329
        %v331 = vsel %vm233, %v305, -inf
        %v332 = vrot.slane %v331, 4
        %v333 = vmax.f32 %v331, %v332
        %v334 = vrot.slane %v333, 2
        %v335 = vmax.f32 %v333, %v334
        %v336 = vrot.slane %v335, 1
        %v337 = vmax.f32 %v335, %v336
        %v338 = vld [vmem:[#allocation5] sm:$0xff]
        %v339 = vld [vmem:[#allocation5 + $0x8] sm:$0xff]
        %v340 = vld [vmem:[#allocation5 + $0x10] sm:$0xff]
        %v341 = vld [vmem:[#allocation5 + $0x18] sm:$0xff]
        %v342 = vld [vmem:[#allocation5 + $0x20] sm:$0xff]
        %v343 = vld [vmem:[#allocation5 + $0x28] sm:$0xff]
        %v344 = vld [vmem:[#allocation5 + $0x30] sm:$0xff]
        %v345 = vld [vmem:[#allocation5 + $0x38] sm:$0xff]
        %v346 = vld [vmem:[#allocation5 + $0x40] sm:$0xff]
        %v347 = vld [vmem:[#allocation5 + $0x48] sm:$0xff]
        %v348 = vld [vmem:[#allocation5 + $0x50] sm:$0xff]
        %v349 = vld [vmem:[#allocation5 + $0x58] sm:$0xff]
        %v350 = vld [vmem:[#allocation5 + $0x60] sm:$0xff]
        %v351 = vld [vmem:[#allocation5 + $0x68] sm:$0xff]
        %v352 = vld [vmem:[#allocation5 + $0x70] sm:$0xff]
        %v353 = vld [vmem:[#allocation5 + $0x78] sm:$0xff]
        %v354 = vld [vmem:[#allocation5 + $0x80] sm:$0xff]
        %v355 = vld [vmem:[#allocation5 + $0x88] sm:$0xff]
        %v356 = vld [vmem:[#allocation5 + $0x90] sm:$0xff]
        %v357 = vld [vmem:[#allocation5 + $0x98] sm:$0xff]
        %v358 = vld [vmem:[#allocation5 + $0xa0] sm:$0xff]
        %v359 = vld [vmem:[#allocation5 + $0xa8] sm:$0xff]
        %v360 = vld [vmem:[#allocation5 + $0xb0] sm:$0xff]
        %v361 = vld [vmem:[#allocation5 + $0xb8] sm:$0xff]
        %v362 = vld [vmem:[#allocation5 + $0xc0] sm:$0xff]
        %v363 = vld [vmem:[#allocation5 + $0xc8] sm:$0xff]
        %v364 = vld [vmem:[#allocation5 + $0xd0] sm:$0xff]
        %v365 = vld [vmem:[#allocation5 + $0xd8] sm:$0xff]
        %v366 = vld [vmem:[#allocation5 + $0xe0] sm:$0xff]
        %v367 = vld [vmem:[#allocation5 + $0xe8] sm:$0xff]
        %v368 = vld [vmem:[#allocation5 + $0xf0] sm:$0xff]
        %v369 = vld [vmem:[#allocation5 + $0xf8] sm:$0xff]
        %v370 = vld [vmem:[#allocation5 + $0x100] sm:$0xff]
        %v371 = vld [vmem:[#allocation5 + $0x108] sm:$0xff]
        %v372 = vld [vmem:[#allocation5 + $0x110] sm:$0xff]
        %v373 = vld [vmem:[#allocation5 + $0x118] sm:$0xff]
        %v374 = vld [vmem:[#allocation5 + $0x120] sm:$0xff]
        %v375 = vld [vmem:[#allocation5 + $0x128] sm:$0xff]
        %v376 = vld [vmem:[#allocation5 + $0x130] sm:$0xff]
        %v377 = vld [vmem:[#allocation5 + $0x138] sm:$0xff]
        %v378 = vld [vmem:[#allocation5 + $0x140] sm:$0xff]
        %v379 = vld [vmem:[#allocation5 + $0x148] sm:$0xff]
        %v380 = vld [vmem:[#allocation5 + $0x150] sm:$0xff]
        %v381 = vld [vmem:[#allocation5 + $0x158] sm:$0xff]
        %v382 = vld [vmem:[#allocation5 + $0x160] sm:$0xff]
        %v383 = vld [vmem:[#allocation5 + $0x168] sm:$0xff]
        %v384 = vld [vmem:[#allocation5 + $0x170] sm:$0xff]
        %v385 = vld [vmem:[#allocation5 + $0x178] sm:$0xff]
        %v386 = vld [vmem:[#allocation5 + $0x180] sm:$0xff]
        %v387 = vld [vmem:[#allocation5 + $0x188] sm:$0xff]
        %v388 = vld [vmem:[#allocation5 + $0x190] sm:$0xff]
        %v389 = vld [vmem:[#allocation5 + $0x198] sm:$0xff]
        %v390 = vld [vmem:[#allocation5 + $0x1a0] sm:$0xff]
        %v391 = vld [vmem:[#allocation5 + $0x1a8] sm:$0xff]
        %v392 = vld [vmem:[#allocation5 + $0x1b0] sm:$0xff]
        %v393 = vld [vmem:[#allocation5 + $0x1b8] sm:$0xff]
        %v394 = vld [vmem:[#allocation5 + $0x1c0] sm:$0xff]
        %v395 = vld [vmem:[#allocation5 + $0x1c8] sm:$0xff]
        %v396 = vld [vmem:[#allocation5 + $0x1d0] sm:$0xff]
        %v397 = vld [vmem:[#allocation5 + $0x1d8] sm:$0xff]
        %v398 = vld [vmem:[#allocation5 + $0x1e0] sm:$0xff]
        %v399 = vld [vmem:[#allocation5 + $0x1e8] sm:$0xff]
        %v400 = vld [vmem:[#allocation5 + $0x1f0] sm:$0xff]
        %v401 = vld [vmem:[#allocation5 + $0x1f8] sm:$0xff]
        %v402 = vld [vmem:[#allocation5 + $0x200] sm:$0xff]
        %v403 = vld [vmem:[#allocation5 + $0x208] sm:$0xff]
        %v404 = vld [vmem:[#allocation5 + $0x210] sm:$0xff]
        %v405 = vld [vmem:[#allocation5 + $0x218] sm:$0xff]
        %v406 = vld [vmem:[#allocation5 + $0x220] sm:$0xff]
        %v407 = vld [vmem:[#allocation5 + $0x228] sm:$0xff]
        %v408 = vld [vmem:[#allocation5 + $0x230] sm:$0xff]
        %v409 = vld [vmem:[#allocation5 + $0x238] sm:$0xff]
        %v410 = vld [vmem:[#allocation5 + $0x240] sm:$0xff]
        %v411 = vld [vmem:[#allocation5 + $0x248] sm:$0xff]
        %v412 = vld [vmem:[#allocation5 + $0x250] sm:$0xff]
        %v413 = vld [vmem:[#allocation5 + $0x258] sm:$0xff]
        %v414 = vld [vmem:[#allocation5 + $0x260] sm:$0xff]
        %v415 = vld [vmem:[#allocation5 + $0x268] sm:$0xff]
        %v416 = vld [vmem:[#allocation5 + $0x270] sm:$0xff]
        %v417 = vld [vmem:[#allocation5 + $0x278] sm:$0xff]
        %v418 = vld [vmem:[#allocation5 + $0x280] sm:$0xff]
        %v419 = vld [vmem:[#allocation5 + $0x288] sm:$0xff]
        %v420 = vld [vmem:[#allocation5 + $0x290] sm:$0xff]
        %v421 = vld [vmem:[#allocation5 + $0x298] sm:$0xff]
        %v422 = vld [vmem:[#allocation5 + $0x2a0] sm:$0xff]
        %v423 = vld [vmem:[#allocation5 + $0x2a8] sm:$0xff]
        %v424 = vld [vmem:[#allocation5 + $0x2b0] sm:$0xff]
        %v425 = vld [vmem:[#allocation5 + $0x2b8] sm:$0xff]
        %v426 = vld [vmem:[#allocation5 + $0x2c0] sm:$0xff]
        %v427 = vld [vmem:[#allocation5 + $0x2c8] sm:$0xff]
        %v428 = vld [vmem:[#allocation5 + $0x2d0] sm:$0xff]
        %v429 = vld [vmem:[#allocation5 + $0x2d8] sm:$0xff]
        %v430 = vld [vmem:[#allocation5 + $0x2e0] sm:$0xff]
        %v431 = vld [vmem:[#allocation5 + $0x2e8] sm:$0xff]
        %v432 = vld [vmem:[#allocation5 + $0x2f0] sm:$0xff]
        %v433 = vld [vmem:[#allocation5 + $0x2f8] sm:$0xff]
        %v434 = vld [vmem:[#allocation5 + $0x300] sm:$0xff]
        %v435 = vld [vmem:[#allocation5 + $0x308] sm:$0xff]
        %v436 = vld [vmem:[#allocation5 + $0x310] sm:$0xff]
        %v437 = vld [vmem:[#allocation5 + $0x318] sm:$0xff]
        %v438 = vld [vmem:[#allocation5 + $0x320] sm:$0xff]
        %v439 = vld [vmem:[#allocation5 + $0x328] sm:$0xff]
        %v440 = vld [vmem:[#allocation5 + $0x330] sm:$0xff]
        %v441 = vld [vmem:[#allocation5 + $0x338] sm:$0xff]
        %v442 = vld [vmem:[#allocation5 + $0x340] sm:$0xff]
        %v443 = vld [vmem:[#allocation5 + $0x348] sm:$0xff]
        %v444 = vld [vmem:[#allocation5 + $0x350] sm:$0xff]
        %v445 = vld [vmem:[#allocation5 + $0x358] sm:$0xff]
        %v446 = vld [vmem:[#allocation5 + $0x360] sm:$0xff]
        %v447 = vld [vmem:[#allocation5 + $0x368] sm:$0xff]
        %v448 = vld [vmem:[#allocation5 + $0x370] sm:$0xff]
        %v449 = vld [vmem:[#allocation5 + $0x378] sm:$0xff]
        %v450 = vld [vmem:[#allocation5 + $0x380] sm:$0xff]
        %v451 = vld [vmem:[#allocation5 + $0x388] sm:$0xff]
        %v452 = vld [vmem:[#allocation5 + $0x390] sm:$0xff]
        %v453 = vld [vmem:[#allocation5 + $0x398] sm:$0xff]
        %v454 = vld [vmem:[#allocation5 + $0x3a0] sm:$0xff]
        %v455 = vld [vmem:[#allocation5 + $0x3a8] sm:$0xff]
        %v456 = vld [vmem:[#allocation5 + $0x3b0] sm:$0xff]
        %v457 = vld [vmem:[#allocation5 + $0x3b8] sm:$0xff]
        %v458 = vld [vmem:[#allocation5 + $0x3c0] sm:$0xff]
        %v459 = vld [vmem:[#allocation5 + $0x3c8] sm:$0xff]
        %v460 = vld [vmem:[#allocation5 + $0x3d0] sm:$0xff]
        %v461 = vld [vmem:[#allocation5 + $0x3d8] sm:$0xff]
        %v462 = vld [vmem:[#allocation5 + $0x3e0] sm:$0xff]
        %v463 = vld [vmem:[#allocation5 + $0x3e8] sm:$0xff]
        %v464 = vld [vmem:[#allocation5 + $0x3f0] sm:$0xff]
        %v465 = vld [vmem:[#allocation5 + $0x3f8] sm:$0xff]
        %466 = vmatprep.subr.mxu0 %v369
        %467 = vmatpush1.msra.mxu0 %v368
        %468 = vmatprep.subr.mxu0 %v367
        %469 = vmatpush1.msra.mxu0 %v366
        %470 = vmatprep.subr.mxu0 %v365
        %471 = vmatpush1.msra.mxu0 %v364
        %472 = vmatprep.subr.mxu0 %v363
        %473 = vmatpush1.msra.mxu0 %v362
        %474 = vmatprep.subr.mxu0 %v361
        %475 = vmatpush1.msra.mxu0 %v360
        %476 = vmatprep.subr.mxu0 %v359
        %477 = vmatpush1.msra.mxu0 %v358
        %478 = vmatprep.subr.mxu0 %v357
        %479 = vmatpush1.msra.mxu0 %v356
        %480 = vmatprep.subr.mxu0 %v355
        %481 = vmatpush1.msra.mxu0 %v354
        %482 = vmatprep.subr.mxu0 %v353
        %483 = vmatpush1.msra.mxu0 %v352
        %484 = vmatprep.subr.mxu0 %v351
        %485 = vmatpush1.msra.mxu0 %v350
        %486 = vmatprep.subr.mxu0 %v349
        %487 = vmatpush1.msra.mxu0 %v348
        %488 = vmatprep.subr.mxu0 %v347
        %489 = vmatpush1.msra.mxu0 %v346
        %490 = vmatprep.subr.mxu0 %v345
        %491 = vmatpush1.msra.mxu0 %v344
        %492 = vmatprep.subr.mxu0 %v343
        %493 = vmatpush1.msra.mxu0 %v342
        %494 = vmatprep.subr.mxu0 %v341
        %495 = vmatpush1.msra.mxu0 %v340
        %496 = vmatprep.subr.mxu0 %v339
        %497 = vmatpush1.msra.mxu0 %v338
        %498 = vmatprep.subr.mxu0 %v401
        %499 = vmatpush2.msra.mxu0 %v400
        %500 = vmatprep.subr.mxu0 %v399
        %501 = vmatpush2.msra.mxu0 %v398
        %502 = vmatprep.subr.mxu0 %v397
        %503 = vmatpush2.msra.mxu0 %v396
        %504 = vmatprep.subr.mxu0 %v395
        %505 = vmatpush2.msra.mxu0 %v394
        %506 = vmatprep.subr.mxu0 %v393
        %507 = vmatpush2.msra.mxu0 %v392
        %508 = vmatprep.subr.mxu0 %v391
        %509 = vmatpush2.msra.mxu0 %v390
        %510 = vmatprep.subr.mxu0 %v389
        %511 = vmatpush2.msra.mxu0 %v388
        %512 = vmatprep.subr.mxu0 %v387
        %513 = vmatpush2.msra.mxu0 %v386
        %514 = vmatprep.subr.mxu0 %v385
        %515 = vmatpush2.msra.mxu0 %v384
        %516 = vmatprep.subr.mxu0 %v383
        %517 = vmatpush2.msra.mxu0 %v382
        %518 = vmatprep.subr.mxu0 %v381
        %519 = vmatpush2.msra.mxu0 %v380
        %520 = vmatprep.subr.mxu0 %v379
        %521 = vmatpush2.msra.mxu0 %v378
        %522 = vmatprep.subr.mxu0 %v377
        %523 = vmatpush2.msra.mxu0 %v376
        %524 = vmatprep.subr.mxu0 %v375
        %525 = vmatpush2.msra.mxu0 %v374
        %526 = vmatprep.subr.mxu0 %v373
        %527 = vmatpush2.msra.mxu0 %v372
        %528 = vmatprep.subr.mxu0 %v371
        %529 = vmatpush2.msra.mxu0 %v370
        %530 = vmatprep.mubr.f32.mxu0 %v323
        %531 = vmatmul.mubr.f32.gmra.mxu0 %v322
        %v532 = vpop.f32.mrf.mxu0
        %v533 = vadd.f32 0.0, %v532
        %v534 = vpop.f32.mrf.mxu0
        %v535 = vadd.f32 0.0, %v534
        %536 = vdwg.mxu0
        %537 = vmatprep.subr.mxu0 %v433
        %538 = vmatpush1.msra.mxu0 %v432
        %539 = vmatprep.subr.mxu0 %v431
        %540 = vmatpush1.msra.mxu0 %v430
        %541 = vmatprep.subr.mxu0 %v429
        %542 = vmatpush1.msra.mxu0 %v428
        %543 = vmatprep.subr.mxu0 %v427
        %544 = vmatpush1.msra.mxu0 %v426
        %545 = vmatprep.subr.mxu0 %v425
        %546 = vmatpush1.msra.mxu0 %v424
        %547 = vmatprep.subr.mxu0 %v423
        %548 = vmatpush1.msra.mxu0 %v422
        %549 = vmatprep.subr.mxu0 %v421
        %550 = vmatpush1.msra.mxu0 %v420
        %551 = vmatprep.subr.mxu0 %v419
        %552 = vmatpush1.msra.mxu0 %v418
        %553 = vmatprep.subr.mxu0 %v417
        %554 = vmatpush1.msra.mxu0 %v416
        %555 = vmatprep.subr.mxu0 %v415
        %556 = vmatpush1.msra.mxu0 %v414
        %557 = vmatprep.subr.mxu0 %v413
        %558 = vmatpush1.msra.mxu0 %v412
        %559 = vmatprep.subr.mxu0 %v411
        %560 = vmatpush1.msra.mxu0 %v410
        %561 = vmatprep.subr.mxu0 %v409
        %562 = vmatpush1.msra.mxu0 %v408
        %563 = vmatprep.subr.mxu0 %v407
        %564 = vmatpush1.msra.mxu0 %v406
        %565 = vmatprep.subr.mxu0 %v405
        %566 = vmatpush1.msra.mxu0 %v404
        %567 = vmatprep.subr.mxu0 %v403
        %568 = vmatpush1.msra.mxu0 %v402
        %569 = vmatprep.subr.mxu0 %v465
        %570 = vmatpush2.msra.mxu0 %v464
        %571 = vmatprep.subr.mxu0 %v463
        %572 = vmatpush2.msra.mxu0 %v462
        %573 = vmatprep.subr.mxu0 %v461
        %574 = vmatpush2.msra.mxu0 %v460
        %575 = vmatprep.subr.mxu0 %v459
        %576 = vmatpush2.msra.mxu0 %v458
        %577 = vmatprep.subr.mxu0 %v457
        %578 = vmatpush2.msra.mxu0 %v456
        %579 = vmatprep.subr.mxu0 %v455
        %580 = vmatpush2.msra.mxu0 %v454
        %581 = vmatprep.subr.mxu0 %v453
        %582 = vmatpush2.msra.mxu0 %v452
        %583 = vmatprep.subr.mxu0 %v451
        %584 = vmatpush2.msra.mxu0 %v450
        %585 = vmatprep.subr.mxu0 %v449
        %586 = vmatpush2.msra.mxu0 %v448
        %587 = vmatprep.subr.mxu0 %v447
        %588 = vmatpush2.msra.mxu0 %v446
        %589 = vmatprep.subr.mxu0 %v445
        %590 = vmatpush2.msra.mxu0 %v444
        %591 = vmatprep.subr.mxu0 %v443
        %592 = vmatpush2.msra.mxu0 %v442
        %593 = vmatprep.subr.mxu0 %v441
        %594 = vmatpush2.msra.mxu0 %v440
        %595 = vmatprep.subr.mxu0 %v439
        %596 = vmatpush2.msra.mxu0 %v438
        %597 = vmatprep.subr.mxu0 %v437
        %598 = vmatpush2.msra.mxu0 %v436
        %599 = vmatprep.subr.mxu0 %v435
        %600 = vmatpush2.msra.mxu0 %v434
        %601 = vmatprep.mubr.f32.mxu0 %v337
        %602 = vmatmul.mubr.f32.gmra.mxu0 %v330
        %v603 = vpop.f32.mrf.mxu0
        %v604 = vadd.f32 %v533, %v603
        %v605 = vpop.f32.mrf.mxu0
        %v606 = vadd.f32 %v535, %v605
        %607 = vdwg.mxu0
        %v608 = vxor.u32 %v604, 2147483648
        %v609 = vxor.u32 %v606, 2147483648
        %v610 = vmul.f32 %v608, 1.442695
        %v611 = vpow.pop %v610
        %v612 = vmul.f32 %v609, 1.442695
        %v613 = vpow.pop %v612
        %v614 = vadd.f32 %v611, 1.0
        %v615 = vadd.f32 %v613, 1.0
        %v616 = vrcp.pop %v614
        %v617 = vmul.f32 1.0, %v616
        %v618 = vrcp.pop %v615
        %v619 = vmul.f32 1.0, %v618
        %v620 = vlaneseq
        %v621 = vshrl.u32 %v620, 7
        %v622 = vsub.s32 0, %v621
        %v623 = vrot.slane %v617, %v622
        %v624 = vlaneseq
        %v625 = vshrl.u32 %v624, 7
        %v626 = vsub.s32 0, %v625
        %v627 = vrot.slane %v619, %v626
        %v630 = vcombine.low %v623, %v627
        %v632 = vmul.f32 %v303, %v630
        %633 = vst [vmem:[%s228] sm:$0xff] %v632
        %s634 = sand.u32 %s119, 1
        %s635 = scalar_lea.sflag [#allocation4], %s634
        %s636 = sand.u32 %s119, 1
        %s637 = smul.addr %s636, 8
        %s638 = scalar_lea.vmem [#allocation7], %s637
        // Predicated region
        $region45: #{tpu_custom_call.1} parent=35 // pred_check
          %p639 = pneg %p129
        $region46: #{tpu_custom_call.1} parent=35 // pred_check_branch
          %641 = sbr.rel (%p639) target = $region48
        $region47: #{tpu_custom_call.1} parent=35 // pred_region
          %s643 = ssub.s32 128, 128
          %644 = vsyncadd %s635, %s643
          %s645 = smul.addr %s22, 2
          %s646 = smul.addr %s645, 64
          %s647 = scalar_lea.hbm %s4, %s646
          %s649 = sshll.u32 %s638, 4
          %s650 = int_to_ptr.vmem [resolvable:$true] %s649
          %652 = dma.vmem_to_hbm [thread:$0]  %s650, 128, %s647, %s635
        $region48: #{tpu_custom_call.1} parent=35 // pred_fallthru
          _
      $region36: #{tpu_custom_call.1} parent=5 // pred_fallthru
        _
      %p653 = scmp.le.s32.totalorder 2, %s17
      // Predicated region
      $region49: #{tpu_custom_call.1} parent=5 // pred_check
        %p654 = pneg %p653
      $region50: #{tpu_custom_call.1} parent=5 // pred_check_branch
        %656 = sbr.rel (%p654) target = $region52
      $region51: #{tpu_custom_call.1} parent=5 // pred_region
        %s657 = ssub.s32 %s17, 2
        // Predicated region
        $region53: #{tpu_custom_call.1} parent=51 // pred_check
          %p658 = pneg %p135
        $region54: #{tpu_custom_call.1} parent=51 // pred_check_branch
          %660 = sbr.rel (%p658) target = $region56
        $region55: #{tpu_custom_call.1} parent=51 // pred_region
          %s661 = sand.u32 %s120, 1
          %s662 = scalar_lea.sflag [#allocation4], %s661
          %s663 = sand.u32 %s120, 1
          %s664 = smul.addr %s663, 8
          %s665 = scalar_lea.vmem [#allocation7], %s664
          %666 = dma.done %s662, 128
        $region56: #{tpu_custom_call.1} parent=51 // pred_fallthru
          _
      $region52: #{tpu_custom_call.1} parent=5 // pred_fallthru
        _
    $region6: #{tpu_custom_call.1} parent=1 // loop_footer
      %s21 = sadd.s32 1, %s17
    $region7: #{tpu_custom_call.1} parent=1 // loop_footer_branch
      %16 = sbr.rel target = $region3
    $region8: #{tpu_custom_call.1} parent=1 // loop_exit
      _
    %667 = vsyncpa [#allocation3], 1
    %s668 = scalar_lea.sflag [#allocation3], 1
    %669 = vsyncpa %s668, 1
    %670 = vsyncpa [#allocation6], 1
    %671 = vsyncpa [#allocation4], 1
    %s672 = scalar_lea.sflag [#allocation4], 1
    %673 = vsyncpa %s672, 1

// kernel: tpu_custom_call.1
$region0: #{tpu_custom_call.1}
  #allocation0 [shape = 'u32[]', space=smem, size = 0x4, offset = 0x4, fixed_abs, tag = 'smem constant byte address 0x4 - core index']
  #allocation1 [shape = 'u32[144,128]{1,0:T(1,128)}', space=vmem, size = 0x12000, scoped, tag = 'internal scratch']
  %s0 = inlined_call_operand.hbm [shape: f32[2,4,256], index: 0, kind: input, shape index: {}]
  %s1 = inlined_call_operand.vmem [shape: f32[4,1], index: 1, kind: input, shape index: {}]
  %s2 = inlined_call_operand.vmem [shape: f32[1,4], index: 2, kind: input, shape index: {}]
  %s3 = inlined_call_operand.hbm [shape: f32[512,256], index: 3, kind: input, shape index: {}]
  %s4 = inlined_call_operand.hbm [shape: f32[2,4,256], index: 4, kind: output, shape index: {}]
  %s5 = sld [smem:[#allocation0]]
  $region57: #{tpu_custom_call.1} parent=0
    _
  %s7 = ssub.s32 1, %s5
  %s8 = scalar_select 0, %s7, %s5
  $region1: #{tpu_custom_call.1} parent=0
    #allocation2 [shape = 'u8[8192]{0}', space=vmem, size = 0x2000, scoped, tag = 'input window, operand 0']
    #allocation3 [shape = 's32[2]{0}', space=sflag, size = 0x8, scoped, tag = 'scoped memory for tpu_custom_call.1']
    #allocation4 [shape = 's32[2]{0}', space=sflag, size = 0x8, scoped, tag = 'scoped memory for tpu_custom_call.1']
    #allocation5 [shape = 'u8[524288]{0}', space=vmem, size = 0x80000, scoped, tag = 'input window, operand 3, single buffered']
    #allocation6 [shape = 's32[1]{0}', space=sflag, size = 0x4, scoped, tag = 'scoped memory for tpu_custom_call.1']
    #allocation7 [shape = 'u8[8192]{0}', space=vmem, size = 0x2000, scoped, tag = 'output window, operand 0']
    %9 = vsyncpa [#allocation3], 0
    %s10 = scalar_lea.sflag [#allocation3], 1
    %11 = vsyncpa %s10, 0
    %12 = vsyncpa [#allocation6], 0
    %13 = vsyncpa [#allocation4], 0
    %s14 = scalar_lea.sflag [#allocation4], 1
    %15 = vsyncpa %s14, 0
    loop: start=0, step=1, limit=4
    $region2: #{tpu_custom_call.1} parent=1 // loop_pre_header
      _
    $region3: #{tpu_custom_call.1} parent=1 // loop_header
      %s17 = sphi 0, %s21
      %p18 = scmp.ge.s32.totalorder %s17, 4
      %s27 = sphi 0, %s29
      %s30 = sphi 0, %s27
      %s31 = sphi 0, %s30
      %s47 = sphi 0, %s31
      %s51 = sphi 0, %s51
      %s53 = sphi 0, %s51
      %s54 = sphi 0, %s53
      %s68 = sphi 0, %s54
      %s72 = sphi 0, %s72
      %s74 = sphi 0, %s72
      %s75 = sphi 0, %s74
      %s89 = sphi 0, %s75
      %s93 = sphi 0, %s93
      %s95 = sphi 0, %s93
      %s96 = sphi 0, %s95
      %s110 = sphi 0, %s96
      %s116 = sphi 0, %s118
      %s119 = sphi 0, %s116
      %s120 = sphi 0, %s119
      %s136 = sphi 0, %s120
    $region4: #{tpu_custom_call.1} parent=1 // loop_header_branch
      %20 = sbr.rel (%p18) target = $region8
    $region5: #{tpu_custom_call.1} parent=1 // loop_body
      %s22 = ssub.s32 %s17, 1
      %s23 = ssub.s32 %s17, 2
      %s24 = sadd.s32 %s17, 1
      %s25 = ssub.s32 %s17, %s24
      %p26 = scmp.eq.s32.totalorder %s25, 0
      %s28 = sadd.s32 %s27, 1
      %s29 = scalar_select %p26, %s27, %s28
      %p32 = pneg %p26
      %p33 = scmp.eq.s32.totalorder %s17, 1
      %p34 = por %p32, %p33
      %p35 = scmp.ne.s32.totalorder %s27, %s30
      %p36 = scmp.eq.s32.totalorder %s17, 0
      %p37 = por %p35, %p36
      %p38 = scmp.ne.s32.totalorder %s27, %s30
      %p39 = scmp.eq.s32.totalorder %s22, 1
      %p40 = por %p38, %p39
      %p41 = scmp.ne.s32.totalorder %s30, %s31
      %p42 = scmp.eq.s32.totalorder %s22, 0
      %p43 = por %p41, %p42
      %p44 = scmp.ne.s32.totalorder %s30, %s31
      %p45 = scmp.eq.s32.totalorder %s23, 1
      %p46 = por %p44, %p45
      %p48 = scmp.ne.s32.totalorder %s31, %s47
      %p49 = scmp.eq.s32.totalorder %s23, 0
      %p50 = por %p48, %p49
      %s52 = sadd.s32 %s51, 1
      %p55 = scmp.eq.s32.totalorder %s17, 1
      %p56 = scmp.ne.s32.totalorder %s51, %s53
      %p57 = scmp.eq.s32.totalorder %s17, 0
      %p58 = por %p56, %p57
      %p59 = scmp.ne.s32.totalorder %s51, %s53
      %p60 = scmp.eq.s32.totalorder %s22, 1
      %p61 = por %p59, %p60
      %p62 = scmp.ne.s32.totalorder %s53, %s54
      %p63 = scmp.eq.s32.totalorder %s22, 0
      %p64 = por %p62, %p63
      %p65 = scmp.ne.s32.totalorder %s53, %s54
      %p66 = scmp.eq.s32.totalorder %s23, 1
      %p67 = por %p65, %p66
      %p69 = scmp.ne.s32.totalorder %s54, %s68
      %p70 = scmp.eq.s32.totalorder %s23, 0
      %p71 = por %p69, %p70
      %s73 = sadd.s32 %s72, 1
      %p76 = scmp.eq.s32.totalorder %s17, 1
      %p77 = scmp.ne.s32.totalorder %s72, %s74
      %p78 = scmp.eq.s32.totalorder %s17, 0
      %p79 = por %p77, %p78
      %p80 = scmp.ne.s32.totalorder %s72, %s74
      %p81 = scmp.eq.s32.totalorder %s22, 1
      %p82 = por %p80, %p81
      %p83 = scmp.ne.s32.totalorder %s74, %s75
      %p84 = scmp.eq.s32.totalorder %s22, 0
      %p85 = por %p83, %p84
      %p86 = scmp.ne.s32.totalorder %s74, %s75
      %p87 = scmp.eq.s32.totalorder %s23, 1
      %p88 = por %p86, %p87
      %p90 = scmp.ne.s32.totalorder %s75, %s89
      %p91 = scmp.eq.s32.totalorder %s23, 0
      %p92 = por %p90, %p91
      %s94 = sadd.s32 %s93, 1
      %p97 = scmp.eq.s32.totalorder %s17, 1
      %p98 = scmp.ne.s32.totalorder %s93, %s95
      %p99 = scmp.eq.s32.totalorder %s17, 0
      %p100 = por %p98, %p99
      %p101 = scmp.ne.s32.totalorder %s93, %s95
      %p102 = scmp.eq.s32.totalorder %s22, 1
      %p103 = por %p101, %p102
      %p104 = scmp.ne.s32.totalorder %s95, %s96
      %p105 = scmp.eq.s32.totalorder %s22, 0
      %p106 = por %p104, %p105
      %p107 = scmp.ne.s32.totalorder %s95, %s96
      %p108 = scmp.eq.s32.totalorder %s23, 1
      %p109 = por %p107, %p108
      %p111 = scmp.ne.s32.totalorder %s96, %s110
      %p112 = scmp.eq.s32.totalorder %s23, 0
      %p113 = por %p111, %p112
      %s114 = ssub.s32 %s17, %s24
      %p115 = scmp.eq.s32.totalorder %s114, 0
      %s117 = sadd.s32 %s116, 1
      %s118 = scalar_select %p115, %s116, %s117
      %p121 = pneg %p115
      %p122 = scmp.eq.s32.totalorder %s17, 1
      %p123 = por %p121, %p122
      %p124 = scmp.ne.s32.totalorder %s116, %s119
      %p125 = scmp.eq.s32.totalorder %s17, 0
      %p126 = por %p124, %p125
      %p127 = scmp.ne.s32.totalorder %s116, %s119
      %p128 = scmp.eq.s32.totalorder %s22, 1
      %p129 = por %p127, %p128
      %p130 = scmp.ne.s32.totalorder %s119, %s120
      %p131 = scmp.eq.s32.totalorder %s22, 0
      %p132 = por %p130, %p131
      %p133 = scmp.ne.s32.totalorder %s119, %s120
      %p134 = scmp.eq.s32.totalorder %s23, 1
      %p135 = por %p133, %p134
      %p137 = scmp.ne.s32.totalorder %s120, %s136
      %p138 = scmp.eq.s32.totalorder %s23, 0
      %p139 = por %p137, %p138
      %p140 = scmp.le.s32.totalorder 1, %s17
      %p141 = scmp.lt.s32.totalorder %s17, 3
      %p142 = pnand %p140, %p141
      %p143 = pneg %p142
      // Predicated region
      $region9: #{tpu_custom_call.1} parent=5 // pred_check
        _
      $region10: #{tpu_custom_call.1} parent=5 // pred_check_branch
        %145 = sbr.rel (%p142) target = $region12
      $region11: #{tpu_custom_call.1} parent=5 // pred_region
        %s146 = ssub.s32 %s17, 1
        // Predicated region
        $region13: #{tpu_custom_call.1} parent=11 // pred_check
          %p147 = pneg %p64
        $region14: #{tpu_custom_call.1} parent=11 // pred_check_branch
          %149 = sbr.rel (%p147) target = $region16
        $region15: #{tpu_custom_call.1} parent=11 // pred_region
          _
        $region16: #{tpu_custom_call.1} parent=11 // pred_fallthru
          _
        // Predicated region
        $region17: #{tpu_custom_call.1} parent=11 // pred_check
          %p150 = pneg %p85
        $region18: #{tpu_custom_call.1} parent=11 // pred_check_branch
          %152 = sbr.rel (%p150) target = $region20
        $region19: #{tpu_custom_call.1} parent=11 // pred_region
          _
        $region20: #{tpu_custom_call.1} parent=11 // pred_fallthru
          _
        // Predicated region
        $region21: #{tpu_custom_call.1} parent=11 // pred_check
          %p153 = pneg %p106
        $region22: #{tpu_custom_call.1} parent=11 // pred_check_branch
          %155 = sbr.rel (%p153) target = $region24
        $region23: #{tpu_custom_call.1} parent=11 // pred_region
          %s157 = ssub.s32 16384, 16384
          %158 = vsyncadd [#allocation6], %s157
          %s159 = sshll.u32 [#allocation5], 4
          %s160 = int_to_ptr.vmem [resolvable:$true] %s159
          %165 = dma.hbm_to_vmem [thread:$0]  %s3, 16384, %s160, [#allocation6], 256, 256, 16
        $region24: #{tpu_custom_call.1} parent=11 // pred_fallthru
          _
      $region12: #{tpu_custom_call.1} parent=5 // pred_fallthru
        _
      %p166 = scmp.lt.s32.totalorder %s17, 2
      // Predicated region
      $region25: #{tpu_custom_call.1} parent=5 // pred_check
        %p167 = pneg %p166
      $region26: #{tpu_custom_call.1} parent=5 // pred_check_branch
        %169 = sbr.rel (%p167) target = $region28
      $region27: #{tpu_custom_call.1} parent=5 // pred_region
        // Predicated region
        $region29: #{tpu_custom_call.1} parent=27 // pred_check
          %p170 = pneg %p37
        $region30: #{tpu_custom_call.1} parent=27 // pred_check_branch
          %172 = sbr.rel (%p170) target = $region32
        $region31: #{tpu_custom_call.1} parent=27 // pred_region
          %s173 = sand.u32 %s27, 1
          %s174 = scalar_lea.sflag [#allocation3], %s173
          %s175 = sand.u32 %s27, 1
          %s176 = smul.addr %s175, 8
          %s177 = scalar_lea.vmem [#allocation2], %s176
          %s179 = ssub.s32 128, 128
          %180 = vsyncadd %s174, %s179
          %s181 = smul.addr %s17, 2
          %s182 = smul.addr %s181, 64
          %s183 = scalar_lea.hbm %s0, %s182
          %s185 = sshll.u32 %s177, 4
          %s186 = int_to_ptr.vmem [resolvable:$true] %s185
          %188 = dma.hbm_to_vmem [thread:$0]  %s183, 128, %s186, %s174
        $region32: #{tpu_custom_call.1} parent=27 // pred_fallthru
          _
      $region28: #{tpu_custom_call.1} parent=5 // pred_fallthru
        _
      %p189 = scmp.le.s32.totalorder 1, %s17
      %p190 = scmp.lt.s32.totalorder %s17, 3
      %p191 = pnand %p189, %p190
      %p192 = pneg %p191
      // Predicated region
      $region33: #{tpu_custom_call.1} parent=5 // pred_check
        _
      $region34: #{tpu_custom_call.1} parent=5 // pred_check_branch
        %194 = sbr.rel (%p191) target = $region36
      $region35: #{tpu_custom_call.1} parent=5 // pred_region
        %s195 = ssub.s32 %s17, 1
        %s196 = sand.u32 %s30, 1
        %s197 = scalar_lea.sflag [#allocation3], %s196
        %s198 = sand.u32 %s30, 1
        %s199 = smul.addr %s198, 8
        %s200 = scalar_lea.vmem [#allocation2], %s199
        // Predicated region
        $region37: #{tpu_custom_call.1} parent=35 // pred_check
          %p201 = pneg %p43
        $region38: #{tpu_custom_call.1} parent=35 // pred_check_branch
          %203 = sbr.rel (%p201) target = $region40
        $region39: #{tpu_custom_call.1} parent=35 // pred_region
          %204 = dma.done %s197, 128
        $region40: #{tpu_custom_call.1} parent=35 // pred_fallthru
          _
        // Predicated region
        $region41: #{tpu_custom_call.1} parent=35 // pred_check
          %p205 = pneg %p106
        $region42: #{tpu_custom_call.1} parent=35 // pred_check_branch
          %207 = sbr.rel (%p205) target = $region44
        $region43: #{tpu_custom_call.1} parent=35 // pred_region
          %208 = dma.done [#allocation6], 16384
        $region44: #{tpu_custom_call.1} parent=35 // pred_fallthru
          _
        %s209 = sand.u32 %s30, 1
        %s210 = scalar_lea.sflag [#allocation3], %s209
        %s211 = sand.u32 %s30, 1
        %s212 = smul.addr %s211, 8
        %s213 = scalar_lea.vmem [#allocation2], %s212
        %p214 = pneg %p43
        %p215 = pneg %p40
        %p216 = pneg %p64
        %p217 = pneg %p61
        %p218 = pneg %p85
        %p219 = pneg %p82
        %p220 = pneg %p106
        %p221 = pneg %p103
        %p222 = pneg %p132
        %p223 = pneg %p129
        %s224 = sand.u32 %s119, 1
        %s225 = scalar_lea.sflag [#allocation4], %s224
        %s226 = sand.u32 %s119, 1
        %s227 = smul.addr %s226, 8
        %s228 = scalar_lea.vmem [#allocation7], %s227
        %v229 = vld [vmem:[%s200] sm:$0xff]
        %v231 = vcombine.high %v229, %v229
        %vm233 = vcmask 1043456
        %v234 = vsel %vm233, %v229, 0.0
        %v235 = vsel %vm233, %v231, 0.0
        %v236 = vadd.f32 %v234, %v235
        %237 = vadd.xlane.f32.xlu0 %v236
        %v238 = vpop.xlane.xlu0 %237
        %v239 = vmul.f32 %v238, 0.00390625
        %v240 = vsel %vm233, %v229, -inf
        %v241 = vsel %vm233, %v231, -inf
        %v242 = vmax.f32 %v240, %v241
        %243 = vmax.xlane.f32.xlu0 %v242
        %v244 = vpop.xlane.xlu0 %243
        %v245 = vld [vmem:[%s1] sm:$0xf]
        %v246 = vmul.f32 %v239, %v245
        %v247 = vmul.f32 %v244, %v245
        %vm248 = vcmask 3072
        %v249 = vsel %vm248, %v246, 0.0
        %v250 = vrot.slane %v249, 4
        %v251 = vadd.f32 %v249, %v250
        %v252 = vrot.slane %v251, 2
        %v253 = vadd.f32 %v251, %v252
        %v254 = vrot.slane %v253, 1
        %v255 = vadd.f32 %v253, %v254
        %v256 = vsel %vm248, %v247, 0.0
        %v257 = vrot.slane %v256, 4
        %v258 = vadd.f32 %v256, %v257
        %v259 = vrot.slane %v258, 2
        %v260 = vadd.f32 %v258, %v259
        %v261 = vrot.slane %v260, 1
        %v262 = vadd.f32 %v260, %v261
        %v263 = vmax.f32 %v255, 0.0
        %v264 = vmax.f32 %v262, 0.0
        %v265 = vld [vmem:[%s2] sm:$0x1]
        %267 = vset.pattern.permute.xlu0 0
        %268 = vperm.xlu0 %267, %v263
        %v269 = vpop.permute.xlu0 %268
        %272 = vset.pattern.permute.xlu0 0
        %273 = vperm.xlu0 %272, %v264
        %v274 = vpop.permute.xlu0 %273
        %v276 = vmul.f32 %v269, %v265
        %v277 = vmul.f32 %v274, %v265
        %v278 = vadd.f32 %v276, 0.0
        %v279 = vadd.f32 %v277, 0.0
        %v280 = vadd.f32 %v278, %v279
        %v281 = vxor.u32 %v280, 2147483648
        %v282 = vmul.f32 %v281, 1.442695
        %v283 = vpow.pop %v282
        %v284 = vadd.f32 %v283, 1.0
        %v285 = vrcp.pop %v284
        %v286 = vmul.f32 1.0, %v285
        %v287 = vlaneseq
        %v288 = vshrl.u32 %v287, 7
        %v289 = vsub.s32 0, %v288
        %v290 = vrot.slane %v286, %v289
        %292 = vbcast.lane.b32.xlu0 %v290, 256
        %v293 = vpop.permute.xlu0 %292
        %v296 = vunpack.c.l.s4 839922192
        %v297 = vunpack.c.0.s8 %v296
        %v298 = vlaneseq
        %v299 = vshrl.u32 %v298, 7
        %v300 = vsub.s32 %v297, %v299
        %v301 = vrot.slane %v293, %v300
        %v303 = vmul.f32 %v229, %v301
        %v305 = vcombine.high %v303, %v303
        %v307 = vsel %vm233, %v303, 0.0
        %v308 = vrot.slane %v307, 4
        %v309 = vadd.f32 %v307, %v308
        %v310 = vrot.slane %v309, 2
        %v311 = vadd.f32 %v309, %v310
        %v312 = vrot.slane %v311, 1
        %v313 = vadd.f32 %v311, %v312
        %v314 = vsel %vm233, %v305, 0.0
        %v315 = vrot.slane %v314, 4
        %v316 = vadd.f32 %v314, %v315
        %v317 = vrot.slane %v316, 2
        %v318 = vadd.f32 %v316, %v317
        %v319 = vrot.slane %v318, 1
        %v320 = vadd.f32 %v318, %v319
        %v321 = vrcp.pop 4.0
        %v322 = vmul.f32 %v313, %v321
        %v323 = vmul.f32 %v320, %v321
        %v324 = vsel %vm233, %v303, -inf
        %v325 = vrot.slane %v324, 4
        %v326 = vmax.f32 %v324, %v325
        %v327 = vrot.slane %v326, 2
        %v328 = vmax.f32 %v326, %v327
        %v329 = vrot.slane %v328, 1
        %v330 = vmax.f32 %v328, %v329
        %v331 = vsel %vm233, %v305, -inf
        %v332 = vrot.slane %v331, 4
        %v333 = vmax.f32 %v331, %v332
        %v334 = vrot.slane %v333, 2
        %v335 = vmax.f32 %v333, %v334
        %v336 = vrot.slane %v335, 1
        %v337 = vmax.f32 %v335, %v336
        %v338 = vld [vmem:[#allocation5] sm:$0xff]
        %v339 = vld [vmem:[#allocation5 + $0x8] sm:$0xff]
        %v340 = vld [vmem:[#allocation5 + $0x10] sm:$0xff]
        %v341 = vld [vmem:[#allocation5 + $0x18] sm:$0xff]
        %v342 = vld [vmem:[#allocation5 + $0x20] sm:$0xff]
        %v343 = vld [vmem:[#allocation5 + $0x28] sm:$0xff]
        %v344 = vld [vmem:[#allocation5 + $0x30] sm:$0xff]
        %v345 = vld [vmem:[#allocation5 + $0x38] sm:$0xff]
        %v346 = vld [vmem:[#allocation5 + $0x40] sm:$0xff]
        %v347 = vld [vmem:[#allocation5 + $0x48] sm:$0xff]
        %v348 = vld [vmem:[#allocation5 + $0x50] sm:$0xff]
        %v349 = vld [vmem:[#allocation5 + $0x58] sm:$0xff]
        %v350 = vld [vmem:[#allocation5 + $0x60] sm:$0xff]
        %v351 = vld [vmem:[#allocation5 + $0x68] sm:$0xff]
        %v352 = vld [vmem:[#allocation5 + $0x70] sm:$0xff]
        %v353 = vld [vmem:[#allocation5 + $0x78] sm:$0xff]
        %v354 = vld [vmem:[#allocation5 + $0x80] sm:$0xff]
        %v355 = vld [vmem:[#allocation5 + $0x88] sm:$0xff]
        %v356 = vld [vmem:[#allocation5 + $0x90] sm:$0xff]
        %v357 = vld [vmem:[#allocation5 + $0x98] sm:$0xff]
        %v358 = vld [vmem:[#allocation5 + $0xa0] sm:$0xff]
        %v359 = vld [vmem:[#allocation5 + $0xa8] sm:$0xff]
        %v360 = vld [vmem:[#allocation5 + $0xb0] sm:$0xff]
        %v361 = vld [vmem:[#allocation5 + $0xb8] sm:$0xff]
        %v362 = vld [vmem:[#allocation5 + $0xc0] sm:$0xff]
        %v363 = vld [vmem:[#allocation5 + $0xc8] sm:$0xff]
        %v364 = vld [vmem:[#allocation5 + $0xd0] sm:$0xff]
        %v365 = vld [vmem:[#allocation5 + $0xd8] sm:$0xff]
        %v366 = vld [vmem:[#allocation5 + $0xe0] sm:$0xff]
        %v367 = vld [vmem:[#allocation5 + $0xe8] sm:$0xff]
        %v368 = vld [vmem:[#allocation5 + $0xf0] sm:$0xff]
        %v369 = vld [vmem:[#allocation5 + $0xf8] sm:$0xff]
        %v370 = vld [vmem:[#allocation5 + $0x100] sm:$0xff]
        %v371 = vld [vmem:[#allocation5 + $0x108] sm:$0xff]
        %v372 = vld [vmem:[#allocation5 + $0x110] sm:$0xff]
        %v373 = vld [vmem:[#allocation5 + $0x118] sm:$0xff]
        %v374 = vld [vmem:[#allocation5 + $0x120] sm:$0xff]
        %v375 = vld [vmem:[#allocation5 + $0x128] sm:$0xff]
        %v376 = vld [vmem:[#allocation5 + $0x130] sm:$0xff]
        %v377 = vld [vmem:[#allocation5 + $0x138] sm:$0xff]
        %v378 = vld [vmem:[#allocation5 + $0x140] sm:$0xff]
        %v379 = vld [vmem:[#allocation5 + $0x148] sm:$0xff]
        %v380 = vld [vmem:[#allocation5 + $0x150] sm:$0xff]
        %v381 = vld [vmem:[#allocation5 + $0x158] sm:$0xff]
        %v382 = vld [vmem:[#allocation5 + $0x160] sm:$0xff]
        %v383 = vld [vmem:[#allocation5 + $0x168] sm:$0xff]
        %v384 = vld [vmem:[#allocation5 + $0x170] sm:$0xff]
        %v385 = vld [vmem:[#allocation5 + $0x178] sm:$0xff]
        %v386 = vld [vmem:[#allocation5 + $0x180] sm:$0xff]
        %v387 = vld [vmem:[#allocation5 + $0x188] sm:$0xff]
        %v388 = vld [vmem:[#allocation5 + $0x190] sm:$0xff]
        %v389 = vld [vmem:[#allocation5 + $0x198] sm:$0xff]
        %v390 = vld [vmem:[#allocation5 + $0x1a0] sm:$0xff]
        %v391 = vld [vmem:[#allocation5 + $0x1a8] sm:$0xff]
        %v392 = vld [vmem:[#allocation5 + $0x1b0] sm:$0xff]
        %v393 = vld [vmem:[#allocation5 + $0x1b8] sm:$0xff]
        %v394 = vld [vmem:[#allocation5 + $0x1c0] sm:$0xff]
        %v395 = vld [vmem:[#allocation5 + $0x1c8] sm:$0xff]
        %v396 = vld [vmem:[#allocation5 + $0x1d0] sm:$0xff]
        %v397 = vld [vmem:[#allocation5 + $0x1d8] sm:$0xff]
        %v398 = vld [vmem:[#allocation5 + $0x1e0] sm:$0xff]
        %v399 = vld [vmem:[#allocation5 + $0x1e8] sm:$0xff]
        %v400 = vld [vmem:[#allocation5 + $0x1f0] sm:$0xff]
        %v401 = vld [vmem:[#allocation5 + $0x1f8] sm:$0xff]
        %v402 = vld [vmem:[#allocation5 + $0x200] sm:$0xff]
        %v403 = vld [vmem:[#allocation5 + $0x208] sm:$0xff]
        %v404 = vld [vmem:[#allocation5 + $0x210] sm:$0xff]
        %v405 = vld [vmem:[#allocation5 + $0x218] sm:$0xff]
        %v406 = vld [vmem:[#allocation5 + $0x220] sm:$0xff]
        %v407 = vld [vmem:[#allocation5 + $0x228] sm:$0xff]
        %v408 = vld [vmem:[#allocation5 + $0x230] sm:$0xff]
        %v409 = vld [vmem:[#allocation5 + $0x238] sm:$0xff]
        %v410 = vld [vmem:[#allocation5 + $0x240] sm:$0xff]
        %v411 = vld [vmem:[#allocation5 + $0x248] sm:$0xff]
        %v412 = vld [vmem:[#allocation5 + $0x250] sm:$0xff]
        %v413 = vld [vmem:[#allocation5 + $0x258] sm:$0xff]
        %v414 = vld [vmem:[#allocation5 + $0x260] sm:$0xff]
        %v415 = vld [vmem:[#allocation5 + $0x268] sm:$0xff]
        %v416 = vld [vmem:[#allocation5 + $0x270] sm:$0xff]
        %v417 = vld [vmem:[#allocation5 + $0x278] sm:$0xff]
        %v418 = vld [vmem:[#allocation5 + $0x280] sm:$0xff]
        %v419 = vld [vmem:[#allocation5 + $0x288] sm:$0xff]
        %v420 = vld [vmem:[#allocation5 + $0x290] sm:$0xff]
        %v421 = vld [vmem:[#allocation5 + $0x298] sm:$0xff]
        %v422 = vld [vmem:[#allocation5 + $0x2a0] sm:$0xff]
        %v423 = vld [vmem:[#allocation5 + $0x2a8] sm:$0xff]
        %v424 = vld [vmem:[#allocation5 + $0x2b0] sm:$0xff]
        %v425 = vld [vmem:[#allocation5 + $0x2b8] sm:$0xff]
        %v426 = vld [vmem:[#allocation5 + $0x2c0] sm:$0xff]
        %v427 = vld [vmem:[#allocation5 + $0x2c8] sm:$0xff]
        %v428 = vld [vmem:[#allocation5 + $0x2d0] sm:$0xff]
        %v429 = vld [vmem:[#allocation5 + $0x2d8] sm:$0xff]
        %v430 = vld [vmem:[#allocation5 + $0x2e0] sm:$0xff]
        %v431 = vld [vmem:[#allocation5 + $0x2e8] sm:$0xff]
        %v432 = vld [vmem:[#allocation5 + $0x2f0] sm:$0xff]
        %v433 = vld [vmem:[#allocation5 + $0x2f8] sm:$0xff]
        %v434 = vld [vmem:[#allocation5 + $0x300] sm:$0xff]
        %v435 = vld [vmem:[#allocation5 + $0x308] sm:$0xff]
        %v436 = vld [vmem:[#allocation5 + $0x310] sm:$0xff]
        %v437 = vld [vmem:[#allocation5 + $0x318] sm:$0xff]
        %v438 = vld [vmem:[#allocation5 + $0x320] sm:$0xff]
        %v439 = vld [vmem:[#allocation5 + $0x328] sm:$0xff]
        %v440 = vld [vmem:[#allocation5 + $0x330] sm:$0xff]
        %v441 = vld [vmem:[#allocation5 + $0x338] sm:$0xff]
        %v442 = vld [vmem:[#allocation5 + $0x340] sm:$0xff]
        %v443 = vld [vmem:[#allocation5 + $0x348] sm:$0xff]
        %v444 = vld [vmem:[#allocation5 + $0x350] sm:$0xff]
        %v445 = vld [vmem:[#allocation5 + $0x358] sm:$0xff]
        %v446 = vld [vmem:[#allocation5 + $0x360] sm:$0xff]
        %v447 = vld [vmem:[#allocation5 + $0x368] sm:$0xff]
        %v448 = vld [vmem:[#allocation5 + $0x370] sm:$0xff]
        %v449 = vld [vmem:[#allocation5 + $0x378] sm:$0xff]
        %v450 = vld [vmem:[#allocation5 + $0x380] sm:$0xff]
        %v451 = vld [vmem:[#allocation5 + $0x388] sm:$0xff]
        %v452 = vld [vmem:[#allocation5 + $0x390] sm:$0xff]
        %v453 = vld [vmem:[#allocation5 + $0x398] sm:$0xff]
        %v454 = vld [vmem:[#allocation5 + $0x3a0] sm:$0xff]
        %v455 = vld [vmem:[#allocation5 + $0x3a8] sm:$0xff]
        %v456 = vld [vmem:[#allocation5 + $0x3b0] sm:$0xff]
        %v457 = vld [vmem:[#allocation5 + $0x3b8] sm:$0xff]
        %v458 = vld [vmem:[#allocation5 + $0x3c0] sm:$0xff]
        %v459 = vld [vmem:[#allocation5 + $0x3c8] sm:$0xff]
        %v460 = vld [vmem:[#allocation5 + $0x3d0] sm:$0xff]
        %v461 = vld [vmem:[#allocation5 + $0x3d8] sm:$0xff]
        %v462 = vld [vmem:[#allocation5 + $0x3e0] sm:$0xff]
        %v463 = vld [vmem:[#allocation5 + $0x3e8] sm:$0xff]
        %v464 = vld [vmem:[#allocation5 + $0x3f0] sm:$0xff]
        %v465 = vld [vmem:[#allocation5 + $0x3f8] sm:$0xff]
        %466 = vmatprep.subr.mxu0 %v369
        %467 = vmatpush1.msra.mxu0 %v368
        %468 = vmatprep.subr.mxu0 %v367
        %469 = vmatpush1.msra.mxu0 %v366
        %470 = vmatprep.subr.mxu0 %v365
        %471 = vmatpush1.msra.mxu0 %v364
        %472 = vmatprep.subr.mxu0 %v363
        %473 = vmatpush1.msra.mxu0 %v362
        %474 = vmatprep.subr.mxu0 %v361
        %475 = vmatpush1.msra.mxu0 %v360
        %476 = vmatprep.subr.mxu0 %v359
        %477 = vmatpush1.msra.mxu0 %v358
        %478 = vmatprep.subr.mxu0 %v357
        %479 = vmatpush1.msra.mxu0 %v356
        %480 = vmatprep.subr.mxu0 %v355
        %481 = vmatpush1.msra.mxu0 %v354
        %482 = vmatprep.subr.mxu0 %v353
        %483 = vmatpush1.msra.mxu0 %v352
        %484 = vmatprep.subr.mxu0 %v351
        %485 = vmatpush1.msra.mxu0 %v350
        %486 = vmatprep.subr.mxu0 %v349
        %487 = vmatpush1.msra.mxu0 %v348
        %488 = vmatprep.subr.mxu0 %v347
        %489 = vmatpush1.msra.mxu0 %v346
        %490 = vmatprep.subr.mxu0 %v345
        %491 = vmatpush1.msra.mxu0 %v344
        %492 = vmatprep.subr.mxu0 %v343
        %493 = vmatpush1.msra.mxu0 %v342
        %494 = vmatprep.subr.mxu0 %v341
        %495 = vmatpush1.msra.mxu0 %v340
        %496 = vmatprep.subr.mxu0 %v339
        %497 = vmatpush1.msra.mxu0 %v338
        %498 = vmatprep.subr.mxu0 %v401
        %499 = vmatpush2.msra.mxu0 %v400
        %500 = vmatprep.subr.mxu0 %v399
        %501 = vmatpush2.msra.mxu0 %v398
        %502 = vmatprep.subr.mxu0 %v397
        %503 = vmatpush2.msra.mxu0 %v396
        %504 = vmatprep.subr.mxu0 %v395
        %505 = vmatpush2.msra.mxu0 %v394
        %506 = vmatprep.subr.mxu0 %v393
        %507 = vmatpush2.msra.mxu0 %v392
        %508 = vmatprep.subr.mxu0 %v391
        %509 = vmatpush2.msra.mxu0 %v390
        %510 = vmatprep.subr.mxu0 %v389
        %511 = vmatpush2.msra.mxu0 %v388
        %512 = vmatprep.subr.mxu0 %v387
        %513 = vmatpush2.msra.mxu0 %v386
        %514 = vmatprep.subr.mxu0 %v385
        %515 = vmatpush2.msra.mxu0 %v384
        %516 = vmatprep.subr.mxu0 %v383
        %517 = vmatpush2.msra.mxu0 %v382
        %518 = vmatprep.subr.mxu0 %v381
        %519 = vmatpush2.msra.mxu0 %v380
        %520 = vmatprep.subr.mxu0 %v379
        %521 = vmatpush2.msra.mxu0 %v378
        %522 = vmatprep.subr.mxu0 %v377
        %523 = vmatpush2.msra.mxu0 %v376
        %524 = vmatprep.subr.mxu0 %v375
        %525 = vmatpush2.msra.mxu0 %v374
        %526 = vmatprep.subr.mxu0 %v373
        %527 = vmatpush2.msra.mxu0 %v372
        %528 = vmatprep.subr.mxu0 %v371
        %529 = vmatpush2.msra.mxu0 %v370
        %530 = vmatprep.mubr.f32.mxu0 %v323
        %531 = vmatmul.mubr.f32.gmra.mxu0 %v322
        %v532 = vpop.f32.mrf.mxu0
        %v533 = vadd.f32 0.0, %v532
        %v534 = vpop.f32.mrf.mxu0
        %v535 = vadd.f32 0.0, %v534
        %536 = vdwg.mxu0
        %537 = vmatprep.subr.mxu0 %v433
        %538 = vmatpush1.msra.mxu0 %v432
        %539 = vmatprep.subr.mxu0 %v431
        %540 = vmatpush1.msra.mxu0 %v430
        %541 = vmatprep.subr.mxu0 %v429
        %542 = vmatpush1.msra.mxu0 %v428
        %543 = vmatprep.subr.mxu0 %v427
        %544 = vmatpush1.msra.mxu0 %v426
        %545 = vmatprep.subr.mxu0 %v425
        %546 = vmatpush1.msra.mxu0 %v424
        %547 = vmatprep.subr.mxu0 %v423
        %548 = vmatpush1.msra.mxu0 %v422
        %549 = vmatprep.subr.mxu0 %v421
        %550 = vmatpush1.msra.mxu0 %v420
        %551 = vmatprep.subr.mxu0 %v419
        %552 = vmatpush1.msra.mxu0 %v418
        %553 = vmatprep.subr.mxu0 %v417
        %554 = vmatpush1.msra.mxu0 %v416
        %555 = vmatprep.subr.mxu0 %v415
        %556 = vmatpush1.msra.mxu0 %v414
        %557 = vmatprep.subr.mxu0 %v413
        %558 = vmatpush1.msra.mxu0 %v412
        %559 = vmatprep.subr.mxu0 %v411
        %560 = vmatpush1.msra.mxu0 %v410
        %561 = vmatprep.subr.mxu0 %v409
        %562 = vmatpush1.msra.mxu0 %v408
        %563 = vmatprep.subr.mxu0 %v407
        %564 = vmatpush1.msra.mxu0 %v406
        %565 = vmatprep.subr.mxu0 %v405
        %566 = vmatpush1.msra.mxu0 %v404
        %567 = vmatprep.subr.mxu0 %v403
        %568 = vmatpush1.msra.mxu0 %v402
        %569 = vmatprep.subr.mxu0 %v465
        %570 = vmatpush2.msra.mxu0 %v464
        %571 = vmatprep.subr.mxu0 %v463
        %572 = vmatpush2.msra.mxu0 %v462
        %573 = vmatprep.subr.mxu0 %v461
        %574 = vmatpush2.msra.mxu0 %v460
        %575 = vmatprep.subr.mxu0 %v459
        %576 = vmatpush2.msra.mxu0 %v458
        %577 = vmatprep.subr.mxu0 %v457
        %578 = vmatpush2.msra.mxu0 %v456
        %579 = vmatprep.subr.mxu0 %v455
        %580 = vmatpush2.msra.mxu0 %v454
        %581 = vmatprep.subr.mxu0 %v453
        %582 = vmatpush2.msra.mxu0 %v452
        %583 = vmatprep.subr.mxu0 %v451
        %584 = vmatpush2.msra.mxu0 %v450
        %585 = vmatprep.subr.mxu0 %v449
        %586 = vmatpush2.msra.mxu0 %v448
        %587 = vmatprep.subr.mxu0 %v447
        %588 = vmatpush2.msra.mxu0 %v446
        %589 = vmatprep.subr.mxu0 %v445
        %590 = vmatpush2.msra.mxu0 %v444
        %591 = vmatprep.subr.mxu0 %v443
        %592 = vmatpush2.msra.mxu0 %v442
        %593 = vmatprep.subr.mxu0 %v441
        %594 = vmatpush2.msra.mxu0 %v440
        %595 = vmatprep.subr.mxu0 %v439
        %596 = vmatpush2.msra.mxu0 %v438
        %597 = vmatprep.subr.mxu0 %v437
        %598 = vmatpush2.msra.mxu0 %v436
        %599 = vmatprep.subr.mxu0 %v435
        %600 = vmatpush2.msra.mxu0 %v434
        %601 = vmatprep.mubr.f32.mxu0 %v337
        %602 = vmatmul.mubr.f32.gmra.mxu0 %v330
        %v603 = vpop.f32.mrf.mxu0
        %v604 = vadd.f32 %v533, %v603
        %v605 = vpop.f32.mrf.mxu0
        %v606 = vadd.f32 %v535, %v605
        %607 = vdwg.mxu0
        %v608 = vxor.u32 %v604, 2147483648
        %v609 = vxor.u32 %v606, 2147483648
        %v610 = vmul.f32 %v608, 1.442695
        %v611 = vpow.pop %v610
        %v612 = vmul.f32 %v609, 1.442695
        %v613 = vpow.pop %v612
        %v614 = vadd.f32 %v611, 1.0
        %v615 = vadd.f32 %v613, 1.0
        %v616 = vrcp.pop %v614
        %v617 = vmul.f32 1.0, %v616
        %v618 = vrcp.pop %v615
        %v619 = vmul.f32 1.0, %v618
        %v620 = vlaneseq
        %v621 = vshrl.u32 %v620, 7
        %v622 = vsub.s32 0, %v621
        %v623 = vrot.slane %v617, %v622
        %v624 = vlaneseq
        %v625 = vshrl.u32 %v624, 7
        %v626 = vsub.s32 0, %v625
        %v627 = vrot.slane %v619, %v626
        %v630 = vcombine.low %v623, %v627
        %v632 = vmul.f32 %v303, %v630
        %633 = vst [vmem:[%s228] sm:$0xff] %v632
        %s634 = sand.u32 %s119, 1
        %s635 = scalar_lea.sflag [#allocation4], %s634
        %s636 = sand.u32 %s119, 1
        %s637 = smul.addr %s636, 8
        %s638 = scalar_lea.vmem [#allocation7], %s637
        // Predicated region
        $region45: #{tpu_custom_call.1} parent=35 // pred_check
          %p639 = pneg %p129
        $region46: #{tpu_custom_call.1} parent=35 // pred_check_branch
          %641 = sbr.rel (%p639) target = $region48
        $region47: #{tpu_custom_call.1} parent=35 // pred_region
          %s643 = ssub.s32 128, 128
          %644 = vsyncadd %s635, %s643
          %s645 = smul.addr %s22, 2
          %s646 = smul.addr %s645, 64
          %s647 = scalar_lea.hbm %s4, %s646
          %s649 = sshll.u32 %s638, 4
          %s650 = int_to_ptr.vmem [resolvable:$true] %s649
          %652 = dma.vmem_to_hbm [thread:$0]  %s650, 128, %s647, %s635
        $region48: #{tpu_custom_call.1} parent=35 // pred_fallthru
          _
      $region36: #{tpu_custom_call.1} parent=5 // pred_fallthru
        _
      %p653 = scmp.le.s32.totalorder 2, %s17
      // Predicated region
      $region49: #{tpu_custom_call.1} parent=5 // pred_check
        %p654 = pneg %p653
      $region50: #{tpu_custom_call.1} parent=5 // pred_check_branch
        %656 = sbr.rel (%p654) target = $region52
      $region51: #{tpu_custom_call.1} parent=5 // pred_region
        %s657 = ssub.s32 %s17, 2
        // Predicated region
        $region53: #{tpu_custom_call.1} parent=51 // pred_check
          %p658 = pneg %p135
        $region54: #{tpu_custom_call.1} parent=51 // pred_check_branch
          %660 = sbr.rel (%p658) target = $region56
        $region55: #{tpu_custom_call.1} parent=51 // pred_region
          %s661 = sand.u32 %s120, 1
          %s662 = scalar_lea.sflag [#allocation4], %s661
          %s663 = sand.u32 %s120, 1
          %s664 = smul.addr %s663, 8
          %s665 = scalar_lea.vmem [#allocation7], %s664
          %666 = dma.done %s662, 128
        $region56: #{tpu_custom_call.1} parent=51 // pred_fallthru
          _
      $region52: #{tpu_custom_call.1} parent=5 // pred_fallthru
        _
    $region6: #{tpu_custom_call.1} parent=1 // loop_footer
      %s21 = sadd.s32 1, %s17
    $region7: #{tpu_custom_call.1} parent=1 // loop_footer_branch
      %16 = sbr.rel target = $region3
    $region8: #{tpu_custom_call.1} parent=1 // loop_exit
      _
    %667 = vsyncpa [#allocation3], 1
    %s668 = scalar_lea.sflag [#allocation3], 1
    %669 = vsyncpa %s668, 1
    %670 = vsyncpa [#allocation6], 1
    %671 = vsyncpa [#allocation4], 1
    %s672 = scalar_lea.sflag [#allocation4], 1
    %673 = vsyncpa %s672, 1

</llo_original>
